<compile_context>
chip_gen: v5e
topology: v5e:2x2
jax: 0.10.0
libtpu: 0.0.40
codegen_flags: <defaults>
</compile_context>

<pallas_src>
import jax
import jax.numpy as jnp
from jax.experimental import pallas as pl
from jax.experimental.pallas import tpu as pltpu

# ---------------- synthetic BERT config (small, consistent with the module) ---
VOCAB = 100
MAX_POS = 16
TYPE_VOCAB = 2
HIDDEN = 32
N_HEADS = 4
HEAD_DIM = HIDDEN // N_HEADS
N_LAYERS = 2
INTERMEDIATE = 64
OUTPUT_DIM = 128          # stands in for output_dim=1024 of the real module
LN_EPS = 1e-12
DROPOUT_P = 0.5           # F.dropout default


# ----------------------------- in-kernel helpers ------------------------------
def _gelu(x):
    # TODO(synk): HF BertModel's default is exact erf-GELU; tanh approximation used here.
    c = jnp.float32(0.7978845608028654)  # sqrt(2/pi)
    return 0.5 * x * (1.0 + jnp.tanh(c * (x + 0.044715 * x * x * x)))


def _ln(x, gb):
    # gb: [2, HIDDEN] (row 0 = gamma, row 1 = beta)
    g = gb[0:1, :]
    b = gb[1:2, :]
    mu = jnp.mean(x, axis=-1, keepdims=True)
    d = x - mu
    var = jnp.mean(d * d, axis=-1, keepdims=True)
    return d * jax.lax.rsqrt(var + LN_EPS) * g + b


# ------------------------------ fused forward kernel --------------------------
def _bert_fwd_kernel(
    h0_ref,                      # (1, S, HIDDEN)        summed embeddings, this batch
    emb_ln_ref,                  # (2, HIDDEN)
    wqkv_ref, bqkv_ref,          # (L, H, 3H), (L, 1, 3H)
    wo_ref, bo_ref,              # (L, H, H),  (L, 1, H)
    ln1_ref,                     # (L, 2, H)
    w1_ref, b1_ref,              # (L, H, I),  (L, 1, I)
    w2_ref, b2_ref,              # (L, I, H),  (L, 1, H)
    ln2_ref,                     # (L, 2, H)
    wp_ref, bp_ref,              # (H, H), (1, H)        pooler
    wl_ref, bl_ref,              # (H, OUT), (1, OUT)    final projection
    rand_ref,                    # (1, 1, OUT)           uniform [0,1) for dropout
    out_ref,                     # (1, 1, OUT)
):
    scale = jnp.float32(1.0 / (HEAD_DIM ** 0.5))

    # --- embeddings LayerNorm (gather+sum done as JAX glue outside) ---
    h = _ln(h0_ref[0], emb_ln_ref[...])            # [S, H]

    # --- encoder layers (eval mode: internal dropouts are identity) ---
    for l in range(N_LAYERS):
        # fused QKV projection: one lane-dense (96-wide) matmul instead of 3x32
        qkv = jnp.dot(h, wqkv_ref[l], preferred_element_type=jnp.float32) + bqkv_ref[l]

        # per-head attention with in-kernel head split/merge (static slices)
        parts = []
        for hh in range(N_HEADS):
            q = qkv[:, hh * HEAD_DIM:(hh + 1) * HEAD_DIM]
            k = qkv[:, HIDDEN + hh * HEAD_DIM:HIDDEN + (hh + 1) * HEAD_DIM]
            v = qkv[:, 2 * HIDDEN + hh * HEAD_DIM:2 * HIDDEN + (hh + 1) * HEAD_DIM]
            s = jnp.dot(q, k.T, preferred_element_type=jnp.float32) * scale
            s = s - jnp.max(s, axis=-1, keepdims=True)
            p = jnp.exp(s)
            p = p / jnp.sum(p, axis=-1, keepdims=True)
            parts.append(jnp.dot(p, v, preferred_element_type=jnp.float32))
        ctx = jnp.concatenate(parts, axis=-1)      # [S, H]

        attn_out = jnp.dot(ctx, wo_ref[l], preferred_element_type=jnp.float32) + bo_ref[l]
        h = _ln(h + attn_out, ln1_ref[l])

        ff = _gelu(jnp.dot(h, w1_ref[l], preferred_element_type=jnp.float32) + b1_ref[l])
        ff = jnp.dot(ff, w2_ref[l], preferred_element_type=jnp.float32) + b2_ref[l]
        h = _ln(h + ff, ln2_ref[l])

    # --- pooler: tanh(Linear(seq_out[:, 0, :]))  == hidden_states[1] ---
    pooled = jnp.tanh(
        jnp.dot(h[0:1, :], wp_ref[...], preferred_element_type=jnp.float32) + bp_ref[...]
    )                                              # [1, H]

    # --- final projection + F.dropout(p=0.5, training=True), lane-dense OUT ---
    e = jnp.dot(pooled, wl_ref[...], preferred_element_type=jnp.float32) + bl_ref[...]
    keep = rand_ref[0] >= jnp.float32(DROPOUT_P)
    out_ref[0] = jnp.where(keep, e * jnp.float32(1.0 / (1.0 - DROPOUT_P)), jnp.float32(0.0))


# --------------------------- parameter initialization -------------------------
def init_params(key):
    # TODO(synk): real module loads pretrained BERT weights; synthetic init here.
    keys = iter(jax.random.split(key, 16))

    def nrm(shape, std=0.02):
        return std * jax.random.normal(next(keys), shape, dtype=jnp.float32)

    ln_unit = jnp.stack([jnp.ones((HIDDEN,), jnp.float32),
                         jnp.zeros((HIDDEN,), jnp.float32)])          # [2, H]

    params = {
        "word_emb": nrm((VOCAB, HIDDEN)),
        "pos_emb": nrm((MAX_POS, HIDDEN)),
        "type_emb": nrm((TYPE_VOCAB, HIDDEN)),
        "emb_ln": ln_unit,
        # encoder layers (stacked along a leading layer axis, QKV fused)
        "wqkv": nrm((N_LAYERS, HIDDEN, 3 * HIDDEN)),
        "bqkv": jnp.zeros((N_LAYERS, 1, 3 * HIDDEN), jnp.float32),
        "wo": nrm((N_LAYERS, HIDDEN, HIDDEN)),
        "bo": jnp.zeros((N_LAYERS, 1, HIDDEN), jnp.float32),
        "ln1": jnp.tile(ln_unit[None], (N_LAYERS, 1, 1)),
        "w1": nrm((N_LAYERS, HIDDEN, INTERMEDIATE)),
        "b1": jnp.zeros((N_LAYERS, 1, INTERMEDIATE), jnp.float32),
        "w2": nrm((N_LAYERS, INTERMEDIATE, HIDDEN)),
        "b2": jnp.zeros((N_LAYERS, 1, HIDDEN), jnp.float32),
        "ln2": jnp.tile(ln_unit[None], (N_LAYERS, 1, 1)),
        # pooler
        "wp": nrm((HIDDEN, HIDDEN)),
        "bp": jnp.zeros((1, HIDDEN), jnp.float32),
        # final projection (self.linear in the module)
        "wl": nrm((HIDDEN, OUTPUT_DIM)),
        "bl": jnp.zeros((1, OUTPUT_DIM), jnp.float32),
    }
    return params


# --------------------------------- forward ------------------------------------
def _bcast_spec(arr):
    """Full-array block, same block for every grid step (weights)."""
    zeros = (0,) * arr.ndim
    return pl.BlockSpec(arr.shape, lambda b, _z=zeros: _z)


def text_encoder_forward(params, x, dropout_key):
    # x: (B, 1, S) int32 token ids
    ids = x[:, 0, :]                              # == x.squeeze(1)
    B, S = ids.shape

    # --- BERT embedding gather + sum (glue, done in plain JAX) ---
    # TODO(synk): embedding gather kept outside the kernel (dynamic row gather).
    emb = (jnp.take(params["word_emb"], ids, axis=0)
           + params["pos_emb"][:S][None, :, :]
           + params["type_emb"][0][None, None, :])          # [B, S, H] f32

    # dropout randomness (per-call key; mask applied inside the fused kernel)
    rand = jax.random.uniform(dropout_key, (B, 1, OUTPUT_DIM), dtype=jnp.float32)

    out3 = pl.pallas_call(
        _bert_fwd_kernel,
        out_shape=jax.ShapeDtypeStruct((B, 1, OUTPUT_DIM), jnp.float32),
        grid=(B,),
        in_specs=[
            pl.BlockSpec((1, S, HIDDEN), lambda b: (b, 0, 0)),          # embeddings
            _bcast_spec(params["emb_ln"]),
            _bcast_spec(params["wqkv"]), _bcast_spec(params["bqkv"]),
            _bcast_spec(params["wo"]), _bcast_spec(params["bo"]),
            _bcast_spec(params["ln1"]),
            _bcast_spec(params["w1"]), _bcast_spec(params["b1"]),
            _bcast_spec(params["w2"]), _bcast_spec(params["b2"]),
            _bcast_spec(params["ln2"]),
            _bcast_spec(params["wp"]), _bcast_spec(params["bp"]),
            _bcast_spec(params["wl"]), _bcast_spec(params["bl"]),
            pl.BlockSpec((1, 1, OUTPUT_DIM), lambda b: (b, 0, 0)),      # dropout rand
        ],
        out_specs=pl.BlockSpec((1, 1, OUTPUT_DIM), lambda b: (b, 0, 0)),
        compiler_params=pltpu.CompilerParams(dimension_semantics=("parallel",)),
    )(emb, params["emb_ln"],
      params["wqkv"], params["bqkv"], params["wo"], params["bo"], params["ln1"],
      params["w1"], params["b1"], params["w2"], params["b2"], params["ln2"],
      params["wp"], params["bp"], params["wl"], params["bl"], rand)

    return out3.reshape(B, OUTPUT_DIM)


# ----------------------------------- main --------------------------------------
if __name__ == "__main__":
    key = jax.random.PRNGKey(0)
    pkey, xkey, dkey = jax.random.split(key, 3)
    params = init_params(pkey)

    B, S = 2, 8
    x = jax.random.randint(xkey, (B, 1, S), 0, VOCAB, dtype=jnp.int32)

    out = text_encoder_forward(params, x, dkey)
    out = jax.block_until_ready(out)
    assert out.shape == (B, OUTPUT_DIM) and out.dtype == jnp.float32
    print("KERNEL_OK")
</pallas_src>

<mosaic_0001>
module attributes {stable_mosaic.version = 11 : i64} {
  func.func @_bert_fwd_kernel(%arg0: i32, %arg1: memref<1x8x32xf32, #tpu.memory_space<vmem>>, %arg2: memref<2x32xf32, #tpu.memory_space<vmem>>, %arg3: memref<2x32x96xf32, #tpu.memory_space<vmem>>, %arg4: memref<2x1x96xf32, #tpu.memory_space<vmem>>, %arg5: memref<2x32x32xf32, #tpu.memory_space<vmem>>, %arg6: memref<2x1x32xf32, #tpu.memory_space<vmem>>, %arg7: memref<2x2x32xf32, #tpu.memory_space<vmem>>, %arg8: memref<2x32x64xf32, #tpu.memory_space<vmem>>, %arg9: memref<2x1x64xf32, #tpu.memory_space<vmem>>, %arg10: memref<2x64x32xf32, #tpu.memory_space<vmem>>, %arg11: memref<2x1x32xf32, #tpu.memory_space<vmem>>, %arg12: memref<2x2x32xf32, #tpu.memory_space<vmem>>, %arg13: memref<32x32xf32, #tpu.memory_space<vmem>>, %arg14: memref<1x32xf32, #tpu.memory_space<vmem>>, %arg15: memref<32x128xf32, #tpu.memory_space<vmem>>, %arg16: memref<1x128xf32, #tpu.memory_space<vmem>>, %arg17: memref<1x1x128xf32, #tpu.memory_space<vmem>>, %arg18: memref<1x1x128xf32, #tpu.memory_space<vmem>>) attributes {dimension_semantics = [#tpu.dimension_semantics<parallel>], iteration_bounds = array<i64: 2>, scalar_prefetch = 0 : i64, scratch_operands = 0 : i64, tpu.core_type = #tpu.core_type<tc>, window_params = [{transform_indices = @transform_0, window_bounds = array<i64: 1, 8, 32>}, {pipeline_mode = #tpu.pipeline_mode<synchronous>, transform_indices = @transform_1, window_bounds = array<i64: 2, 32>}, {pipeline_mode = #tpu.pipeline_mode<synchronous>, transform_indices = @transform_2, window_bounds = array<i64: 2, 32, 96>}, {pipeline_mode = #tpu.pipeline_mode<synchronous>, transform_indices = @transform_3, window_bounds = array<i64: 2, 1, 96>}, {pipeline_mode = #tpu.pipeline_mode<synchronous>, transform_indices = @transform_4, window_bounds = array<i64: 2, 32, 32>}, {pipeline_mode = #tpu.pipeline_mode<synchronous>, transform_indices = @transform_5, window_bounds = array<i64: 2, 1, 32>}, {pipeline_mode = #tpu.pipeline_mode<synchronous>, transform_indices = @transform_6, window_bounds = array<i64: 2, 2, 32>}, {pipeline_mode = #tpu.pipeline_mode<synchronous>, transform_indices = @transform_7, window_bounds = array<i64: 2, 32, 64>}, {pipeline_mode = #tpu.pipeline_mode<synchronous>, transform_indices = @transform_8, window_bounds = array<i64: 2, 1, 64>}, {pipeline_mode = #tpu.pipeline_mode<synchronous>, transform_indices = @transform_9, window_bounds = array<i64: 2, 64, 32>}, {pipeline_mode = #tpu.pipeline_mode<synchronous>, transform_indices = @transform_10, window_bounds = array<i64: 2, 1, 32>}, {pipeline_mode = #tpu.pipeline_mode<synchronous>, transform_indices = @transform_11, window_bounds = array<i64: 2, 2, 32>}, {pipeline_mode = #tpu.pipeline_mode<synchronous>, transform_indices = @transform_12, window_bounds = array<i64: 32, 32>}, {pipeline_mode = #tpu.pipeline_mode<synchronous>, transform_indices = @transform_13, window_bounds = array<i64: 1, 32>}, {pipeline_mode = #tpu.pipeline_mode<synchronous>, transform_indices = @transform_14, window_bounds = array<i64: 32, 128>}, {pipeline_mode = #tpu.pipeline_mode<synchronous>, transform_indices = @transform_15, window_bounds = array<i64: 1, 128>}, {transform_indices = @transform_16, window_bounds = array<i64: 1, 1, 128>}, {transform_indices = @transform_17, window_bounds = array<i64: 1, 1, 128>}]} {
    %c0 = arith.constant 0 : index
    %c0_0 = arith.constant 0 : index
    %c0_1 = arith.constant 0 : index
    %0 = vector.load %arg1[%c0, %c0_0, %c0_1] : memref<1x8x32xf32, #tpu.memory_space<vmem>>, vector<1x8x32xf32>
    %1 = vector.shape_cast %0 : vector<1x8x32xf32> to vector<8x32xf32>
    %c0_2 = arith.constant 0 : index
    %c0_3 = arith.constant 0 : index
    %2 = vector.load %arg2[%c0_2, %c0_3] : memref<2x32xf32, #tpu.memory_space<vmem>>, vector<2x32xf32>
    %3 = vector.extract_strided_slice %2 {offsets = [0, 0], sizes = [1, 32], strides = [1, 1]} : vector<2x32xf32> to vector<1x32xf32>
    %4 = vector.extract_strided_slice %2 {offsets = [1, 0], sizes = [1, 32], strides = [1, 1]} : vector<2x32xf32> to vector<1x32xf32>
    %cst = arith.constant dense<0.000000e+00> : vector<8xf32>
    %5 = vector.multi_reduction <add>, %1, %cst [1] : vector<8x32xf32> to vector<8xf32>
    %6 = vector.shape_cast %5 : vector<8xf32> to vector<8x1xf32>
    %cst_4 = arith.constant 3.200000e+01 : f32
    %7 = vector.broadcast %cst_4 : f32 to vector<8x1xf32>
    %8 = arith.divf %6, %7 : vector<8x1xf32>
    %9 = vector.broadcast %8 : vector<8x1xf32> to vector<8x32xf32>
    %10 = arith.subf %1, %9 : vector<8x32xf32>
    %11 = arith.mulf %10, %10 : vector<8x32xf32>
    %cst_5 = arith.constant dense<0.000000e+00> : vector<8xf32>
    %12 = vector.multi_reduction <add>, %11, %cst_5 [1] : vector<8x32xf32> to vector<8xf32>
    %13 = vector.shape_cast %12 : vector<8xf32> to vector<8x1xf32>
    %cst_6 = arith.constant 3.200000e+01 : f32
    %14 = vector.broadcast %cst_6 : f32 to vector<8x1xf32>
    %15 = arith.divf %13, %14 : vector<8x1xf32>
    %cst_7 = arith.constant 9.99999996E-13 : f32
    %16 = vector.broadcast %cst_7 : f32 to vector<8x1xf32>
    %17 = arith.addf %15, %16 : vector<8x1xf32>
    %18 = math.rsqrt %17 : vector<8x1xf32>
    %19 = vector.broadcast %18 : vector<8x1xf32> to vector<8x32xf32>
    %20 = arith.mulf %10, %19 : vector<8x32xf32>
    %21 = vector.broadcast %3 : vector<1x32xf32> to vector<8x32xf32>
    %22 = arith.mulf %20, %21 : vector<8x32xf32>
    %23 = vector.broadcast %4 : vector<1x32xf32> to vector<8x32xf32>
    %24 = arith.addf %22, %23 : vector<8x32xf32>
    %c0_8 = arith.constant 0 : index
    %c0_9 = arith.constant 0 : index
    %c0_10 = arith.constant 0 : index
    %25 = vector.load %arg3[%c0_8, %c0_9, %c0_10] : memref<2x32x96xf32, #tpu.memory_space<vmem>>, vector<1x32x96xf32>
    %26 = vector.shape_cast %25 : vector<1x32x96xf32> to vector<32x96xf32>
    %cst_11 = arith.constant dense<0.000000e+00> : vector<8x96xf32>
    %27 = tpu.matmul %24, %26, %cst_11 {dimension_numbers = #tpu.dot_dimension_numbers<[1], [0], [0], [1], [0, 0, 1, 1], [], []>} : vector<8x32xf32>, vector<32x96xf32>, vector<8x96xf32> -> vector<8x96xf32>
    %c0_12 = arith.constant 0 : index
    %c0_13 = arith.constant 0 : index
    %c0_14 = arith.constant 0 : index
    %28 = vector.load %arg4[%c0_12, %c0_13, %c0_14] : memref<2x1x96xf32, #tpu.memory_space<vmem>>, vector<1x1x96xf32>
    %29 = vector.shape_cast %28 : vector<1x1x96xf32> to vector<1x96xf32>
    %30 = vector.broadcast %29 : vector<1x96xf32> to vector<8x96xf32>
    %31 = arith.addf %27, %30 : vector<8x96xf32>
    %32 = vector.extract_strided_slice %31 {offsets = [0, 0], sizes = [8, 8], strides = [1, 1]} : vector<8x96xf32> to vector<8x8xf32>
    %33 = vector.extract_strided_slice %31 {offsets = [0, 32], sizes = [8, 8], strides = [1, 1]} : vector<8x96xf32> to vector<8x8xf32>
    %34 = vector.extract_strided_slice %31 {offsets = [0, 64], sizes = [8, 8], strides = [1, 1]} : vector<8x96xf32> to vector<8x8xf32>
    %35 = tpu.transpose %33, [1, 0] : vector<8x8xf32> -> vector<8x8xf32>
    %cst_15 = arith.constant dense<0.000000e+00> : vector<8x8xf32>
    %36 = tpu.matmul %32, %35, %cst_15 {dimension_numbers = #tpu.dot_dimension_numbers<[1], [0], [0], [1], [0, 0, 1, 1], [], []>} : vector<8x8xf32>, vector<8x8xf32>, vector<8x8xf32> -> vector<8x8xf32>
    %cst_16 = arith.constant 0.353553385 : f32
    %37 = vector.broadcast %cst_16 : f32 to vector<8x8xf32>
    %38 = arith.mulf %36, %37 : vector<8x8xf32>
    %cst_17 = arith.constant dense<0xFF800000> : vector<8xf32>
    %39 = vector.multi_reduction <maximumf>, %38, %cst_17 [1] : vector<8x8xf32> to vector<8xf32>
    %40 = vector.shape_cast %39 : vector<8xf32> to vector<8x1xf32>
    %41 = vector.broadcast %40 : vector<8x1xf32> to vector<8x8xf32>
    %42 = arith.subf %38, %41 : vector<8x8xf32>
    %43 = math.exp %42 : vector<8x8xf32>
    %cst_18 = arith.constant dense<0.000000e+00> : vector<8xf32>
    %44 = vector.multi_reduction <add>, %43, %cst_18 [1] : vector<8x8xf32> to vector<8xf32>
    %45 = vector.shape_cast %44 : vector<8xf32> to vector<8x1xf32>
    %46 = vector.broadcast %45 : vector<8x1xf32> to vector<8x8xf32>
    %47 = arith.divf %43, %46 : vector<8x8xf32>
    %cst_19 = arith.constant dense<0.000000e+00> : vector<8x8xf32>
    %48 = tpu.matmul %47, %34, %cst_19 {dimension_numbers = #tpu.dot_dimension_numbers<[1], [0], [0], [1], [0, 0, 1, 1], [], []>} : vector<8x8xf32>, vector<8x8xf32>, vector<8x8xf32> -> vector<8x8xf32>
    %49 = vector.extract_strided_slice %31 {offsets = [0, 8], sizes = [8, 8], strides = [1, 1]} : vector<8x96xf32> to vector<8x8xf32>
    %50 = vector.extract_strided_slice %31 {offsets = [0, 40], sizes = [8, 8], strides = [1, 1]} : vector<8x96xf32> to vector<8x8xf32>
    %51 = vector.extract_strided_slice %31 {offsets = [0, 72], sizes = [8, 8], strides = [1, 1]} : vector<8x96xf32> to vector<8x8xf32>
    %52 = tpu.transpose %50, [1, 0] : vector<8x8xf32> -> vector<8x8xf32>
    %cst_20 = arith.constant dense<0.000000e+00> : vector<8x8xf32>
    %53 = tpu.matmul %49, %52, %cst_20 {dimension_numbers = #tpu.dot_dimension_numbers<[1], [0], [0], [1], [0, 0, 1, 1], [], []>} : vector<8x8xf32>, vector<8x8xf32>, vector<8x8xf32> -> vector<8x8xf32>
    %cst_21 = arith.constant 0.353553385 : f32
    %54 = vector.broadcast %cst_21 : f32 to vector<8x8xf32>
    %55 = arith.mulf %53, %54 : vector<8x8xf32>
    %cst_22 = arith.constant dense<0xFF800000> : vector<8xf32>
    %56 = vector.multi_reduction <maximumf>, %55, %cst_22 [1] : vector<8x8xf32> to vector<8xf32>
    %57 = vector.shape_cast %56 : vector<8xf32> to vector<8x1xf32>
    %58 = vector.broadcast %57 : vector<8x1xf32> to vector<8x8xf32>
    %59 = arith.subf %55, %58 : vector<8x8xf32>
    %60 = math.exp %59 : vector<8x8xf32>
    %cst_23 = arith.constant dense<0.000000e+00> : vector<8xf32>
    %61 = vector.multi_reduction <add>, %60, %cst_23 [1] : vector<8x8xf32> to vector<8xf32>
    %62 = vector.shape_cast %61 : vector<8xf32> to vector<8x1xf32>
    %63 = vector.broadcast %62 : vector<8x1xf32> to vector<8x8xf32>
    %64 = arith.divf %60, %63 : vector<8x8xf32>
    %cst_24 = arith.constant dense<0.000000e+00> : vector<8x8xf32>
    %65 = tpu.matmul %64, %51, %cst_24 {dimension_numbers = #tpu.dot_dimension_numbers<[1], [0], [0], [1], [0, 0, 1, 1], [], []>} : vector<8x8xf32>, vector<8x8xf32>, vector<8x8xf32> -> vector<8x8xf32>
    %66 = vector.extract_strided_slice %31 {offsets = [0, 16], sizes = [8, 8], strides = [1, 1]} : vector<8x96xf32> to vector<8x8xf32>
    %67 = vector.extract_strided_slice %31 {offsets = [0, 48], sizes = [8, 8], strides = [1, 1]} : vector<8x96xf32> to vector<8x8xf32>
    %68 = vector.extract_strided_slice %31 {offsets = [0, 80], sizes = [8, 8], strides = [1, 1]} : vector<8x96xf32> to vector<8x8xf32>
    %69 = tpu.transpose %67, [1, 0] : vector<8x8xf32> -> vector<8x8xf32>
    %cst_25 = arith.constant dense<0.000000e+00> : vector<8x8xf32>
    %70 = tpu.matmul %66, %69, %cst_25 {dimension_numbers = #tpu.dot_dimension_numbers<[1], [0], [0], [1], [0, 0, 1, 1], [], []>} : vector<8x8xf32>, vector<8x8xf32>, vector<8x8xf32> -> vector<8x8xf32>
    %cst_26 = arith.constant 0.353553385 : f32
    %71 = vector.broadcast %cst_26 : f32 to vector<8x8xf32>
    %72 = arith.mulf %70, %71 : vector<8x8xf32>
    %cst_27 = arith.constant dense<0xFF800000> : vector<8xf32>
    %73 = vector.multi_reduction <maximumf>, %72, %cst_27 [1] : vector<8x8xf32> to vector<8xf32>
    %74 = vector.shape_cast %73 : vector<8xf32> to vector<8x1xf32>
    %75 = vector.broadcast %74 : vector<8x1xf32> to vector<8x8xf32>
    %76 = arith.subf %72, %75 : vector<8x8xf32>
    %77 = math.exp %76 : vector<8x8xf32>
    %cst_28 = arith.constant dense<0.000000e+00> : vector<8xf32>
    %78 = vector.multi_reduction <add>, %77, %cst_28 [1] : vector<8x8xf32> to vector<8xf32>
    %79 = vector.shape_cast %78 : vector<8xf32> to vector<8x1xf32>
    %80 = vector.broadcast %79 : vector<8x1xf32> to vector<8x8xf32>
    %81 = arith.divf %77, %80 : vector<8x8xf32>
    %cst_29 = arith.constant dense<0.000000e+00> : vector<8x8xf32>
    %82 = tpu.matmul %81, %68, %cst_29 {dimension_numbers = #tpu.dot_dimension_numbers<[1], [0], [0], [1], [0, 0, 1, 1], [], []>} : vector<8x8xf32>, vector<8x8xf32>, vector<8x8xf32> -> vector<8x8xf32>
    %83 = vector.extract_strided_slice %31 {offsets = [0, 24], sizes = [8, 8], strides = [1, 1]} : vector<8x96xf32> to vector<8x8xf32>
    %84 = vector.extract_strided_slice %31 {offsets = [0, 56], sizes = [8, 8], strides = [1, 1]} : vector<8x96xf32> to vector<8x8xf32>
    %85 = vector.extract_strided_slice %31 {offsets = [0, 88], sizes = [8, 8], strides = [1, 1]} : vector<8x96xf32> to vector<8x8xf32>
    %86 = tpu.transpose %84, [1, 0] : vector<8x8xf32> -> vector<8x8xf32>
    %cst_30 = arith.constant dense<0.000000e+00> : vector<8x8xf32>
    %87 = tpu.matmul %83, %86, %cst_30 {dimension_numbers = #tpu.dot_dimension_numbers<[1], [0], [0], [1], [0, 0, 1, 1], [], []>} : vector<8x8xf32>, vector<8x8xf32>, vector<8x8xf32> -> vector<8x8xf32>
    %cst_31 = arith.constant 0.353553385 : f32
    %88 = vector.broadcast %cst_31 : f32 to vector<8x8xf32>
    %89 = arith.mulf %87, %88 : vector<8x8xf32>
    %cst_32 = arith.constant dense<0xFF800000> : vector<8xf32>
    %90 = vector.multi_reduction <maximumf>, %89, %cst_32 [1] : vector<8x8xf32> to vector<8xf32>
    %91 = vector.shape_cast %90 : vector<8xf32> to vector<8x1xf32>
    %92 = vector.broadcast %91 : vector<8x1xf32> to vector<8x8xf32>
    %93 = arith.subf %89, %92 : vector<8x8xf32>
    %94 = math.exp %93 : vector<8x8xf32>
    %cst_33 = arith.constant dense<0.000000e+00> : vector<8xf32>
    %95 = vector.multi_reduction <add>, %94, %cst_33 [1] : vector<8x8xf32> to vector<8xf32>
    %96 = vector.shape_cast %95 : vector<8xf32> to vector<8x1xf32>
    %97 = vector.broadcast %96 : vector<8x1xf32> to vector<8x8xf32>
    %98 = arith.divf %94, %97 : vector<8x8xf32>
    %cst_34 = arith.constant dense<0.000000e+00> : vector<8x8xf32>
    %99 = tpu.matmul %98, %85, %cst_34 {dimension_numbers = #tpu.dot_dimension_numbers<[1], [0], [0], [1], [0, 0, 1, 1], [], []>} : vector<8x8xf32>, vector<8x8xf32>, vector<8x8xf32> -> vector<8x8xf32>
    %100 = tpu.concatenate %48, %65, %82, %99 in 1 : vector<8x8xf32>, vector<8x8xf32>, vector<8x8xf32>, vector<8x8xf32> -> vector<8x32xf32>
    %c0_35 = arith.constant 0 : index
    %c0_36 = arith.constant 0 : index
    %c0_37 = arith.constant 0 : index
    %101 = vector.load %arg5[%c0_35, %c0_36, %c0_37] : memref<2x32x32xf32, #tpu.memory_space<vmem>>, vector<1x32x32xf32>
    %102 = vector.shape_cast %101 : vector<1x32x32xf32> to vector<32x32xf32>
    %cst_38 = arith.constant dense<0.000000e+00> : vector<8x32xf32>
    %103 = tpu.matmul %100, %102, %cst_38 {dimension_numbers = #tpu.dot_dimension_numbers<[1], [0], [0], [1], [0, 0, 1, 1], [], []>} : vector<8x32xf32>, vector<32x32xf32>, vector<8x32xf32> -> vector<8x32xf32>
    %c0_39 = arith.constant 0 : index
    %c0_40 = arith.constant 0 : index
    %c0_41 = arith.constant 0 : index
    %104 = vector.load %arg6[%c0_39, %c0_40, %c0_41] : memref<2x1x32xf32, #tpu.memory_space<vmem>>, vector<1x1x32xf32>
    %105 = vector.shape_cast %104 : vector<1x1x32xf32> to vector<1x32xf32>
    %106 = vector.broadcast %105 : vector<1x32xf32> to vector<8x32xf32>
    %107 = arith.addf %103, %106 : vector<8x32xf32>
    %108 = arith.addf %24, %107 : vector<8x32xf32>
    %c0_42 = arith.constant 0 : index
    %c0_43 = arith.constant 0 : index
    %c0_44 = arith.constant 0 : index
    %109 = vector.load %arg7[%c0_42, %c0_43, %c0_44] : memref<2x2x32xf32, #tpu.memory_space<vmem>>, vector<1x2x32xf32>
    %110 = vector.shape_cast %109 : vector<1x2x32xf32> to vector<2x32xf32>
    %111 = vector.extract_strided_slice %110 {offsets = [0, 0], sizes = [1, 32], strides = [1, 1]} : vector<2x32xf32> to vector<1x32xf32>
    %112 = vector.extract_strided_slice %110 {offsets = [1, 0], sizes = [1, 32], strides = [1, 1]} : vector<2x32xf32> to vector<1x32xf32>
    %cst_45 = arith.constant dense<0.000000e+00> : vector<8xf32>
    %113 = vector.multi_reduction <add>, %108, %cst_45 [1] : vector<8x32xf32> to vector<8xf32>
    %114 = vector.shape_cast %113 : vector<8xf32> to vector<8x1xf32>
    %cst_46 = arith.constant 3.200000e+01 : f32
    %115 = vector.broadcast %cst_46 : f32 to vector<8x1xf32>
    %116 = arith.divf %114, %115 : vector<8x1xf32>
    %117 = vector.broadcast %116 : vector<8x1xf32> to vector<8x32xf32>
    %118 = arith.subf %108, %117 : vector<8x32xf32>
    %119 = arith.mulf %118, %118 : vector<8x32xf32>
    %cst_47 = arith.constant dense<0.000000e+00> : vector<8xf32>
    %120 = vector.multi_reduction <add>, %119, %cst_47 [1] : vector<8x32xf32> to vector<8xf32>
    %121 = vector.shape_cast %120 : vector<8xf32> to vector<8x1xf32>
    %cst_48 = arith.constant 3.200000e+01 : f32
    %122 = vector.broadcast %cst_48 : f32 to vector<8x1xf32>
    %123 = arith.divf %121, %122 : vector<8x1xf32>
    %cst_49 = arith.constant 9.99999996E-13 : f32
    %124 = vector.broadcast %cst_49 : f32 to vector<8x1xf32>
    %125 = arith.addf %123, %124 : vector<8x1xf32>
    %126 = math.rsqrt %125 : vector<8x1xf32>
    %127 = vector.broadcast %126 : vector<8x1xf32> to vector<8x32xf32>
    %128 = arith.mulf %118, %127 : vector<8x32xf32>
    %129 = vector.broadcast %111 : vector<1x32xf32> to vector<8x32xf32>
    %130 = arith.mulf %128, %129 : vector<8x32xf32>
    %131 = vector.broadcast %112 : vector<1x32xf32> to vector<8x32xf32>
    %132 = arith.addf %130, %131 : vector<8x32xf32>
    %c0_50 = arith.constant 0 : index
    %c0_51 = arith.constant 0 : index
    %c0_52 = arith.constant 0 : index
    %133 = vector.load %arg8[%c0_50, %c0_51, %c0_52] : memref<2x32x64xf32, #tpu.memory_space<vmem>>, vector<1x32x64xf32>
    %134 = vector.shape_cast %133 : vector<1x32x64xf32> to vector<32x64xf32>
    %cst_53 = arith.constant dense<0.000000e+00> : vector<8x64xf32>
    %135 = tpu.matmul %132, %134, %cst_53 {dimension_numbers = #tpu.dot_dimension_numbers<[1], [0], [0], [1], [0, 0, 1, 1], [], []>} : vector<8x32xf32>, vector<32x64xf32>, vector<8x64xf32> -> vector<8x64xf32>
    %c0_54 = arith.constant 0 : index
    %c0_55 = arith.constant 0 : index
    %c0_56 = arith.constant 0 : index
    %136 = vector.load %arg9[%c0_54, %c0_55, %c0_56] : memref<2x1x64xf32, #tpu.memory_space<vmem>>, vector<1x1x64xf32>
    %137 = vector.shape_cast %136 : vector<1x1x64xf32> to vector<1x64xf32>
    %138 = vector.broadcast %137 : vector<1x64xf32> to vector<8x64xf32>
    %139 = arith.addf %135, %138 : vector<8x64xf32>
    %cst_57 = arith.constant 5.000000e-01 : f32
    %140 = vector.broadcast %cst_57 : f32 to vector<8x64xf32>
    %141 = arith.mulf %140, %139 : vector<8x64xf32>
    %cst_58 = arith.constant 4.471500e-02 : f32
    %142 = vector.broadcast %cst_58 : f32 to vector<8x64xf32>
    %143 = arith.mulf %142, %139 : vector<8x64xf32>
    %144 = arith.mulf %143, %139 : vector<8x64xf32>
    %145 = arith.mulf %144, %139 : vector<8x64xf32>
    %146 = arith.addf %139, %145 : vector<8x64xf32>
    %cst_59 = arith.constant 0.797884583 : f32
    %147 = vector.broadcast %cst_59 : f32 to vector<8x64xf32>
    %148 = arith.mulf %147, %146 : vector<8x64xf32>
    %149 = math.tanh %148 : vector<8x64xf32>
    %cst_60 = arith.constant 1.000000e+00 : f32
    %150 = vector.broadcast %cst_60 : f32 to vector<8x64xf32>
    %151 = arith.addf %150, %149 : vector<8x64xf32>
    %152 = arith.mulf %141, %151 : vector<8x64xf32>
    %c0_61 = arith.constant 0 : index
    %c0_62 = arith.constant 0 : index
    %c0_63 = arith.constant 0 : index
    %153 = vector.load %arg10[%c0_61, %c0_62, %c0_63] : memref<2x64x32xf32, #tpu.memory_space<vmem>>, vector<1x64x32xf32>
    %154 = vector.shape_cast %153 : vector<1x64x32xf32> to vector<64x32xf32>
    %cst_64 = arith.constant dense<0.000000e+00> : vector<8x32xf32>
    %155 = tpu.matmul %152, %154, %cst_64 {dimension_numbers = #tpu.dot_dimension_numbers<[1], [0], [0], [1], [0, 0, 1, 1], [], []>} : vector<8x64xf32>, vector<64x32xf32>, vector<8x32xf32> -> vector<8x32xf32>
    %c0_65 = arith.constant 0 : index
    %c0_66 = arith.constant 0 : index
    %c0_67 = arith.constant 0 : index
    %156 = vector.load %arg11[%c0_65, %c0_66, %c0_67] : memref<2x1x32xf32, #tpu.memory_space<vmem>>, vector<1x1x32xf32>
    %157 = vector.shape_cast %156 : vector<1x1x32xf32> to vector<1x32xf32>
    %158 = vector.broadcast %157 : vector<1x32xf32> to vector<8x32xf32>
    %159 = arith.addf %155, %158 : vector<8x32xf32>
    %160 = arith.addf %132, %159 : vector<8x32xf32>
    %c0_68 = arith.constant 0 : index
    %c0_69 = arith.constant 0 : index
    %c0_70 = arith.constant 0 : index
    %161 = vector.load %arg12[%c0_68, %c0_69, %c0_70] : memref<2x2x32xf32, #tpu.memory_space<vmem>>, vector<1x2x32xf32>
    %162 = vector.shape_cast %161 : vector<1x2x32xf32> to vector<2x32xf32>
    %163 = vector.extract_strided_slice %162 {offsets = [0, 0], sizes = [1, 32], strides = [1, 1]} : vector<2x32xf32> to vector<1x32xf32>
    %164 = vector.extract_strided_slice %162 {offsets = [1, 0], sizes = [1, 32], strides = [1, 1]} : vector<2x32xf32> to vector<1x32xf32>
    %cst_71 = arith.constant dense<0.000000e+00> : vector<8xf32>
    %165 = vector.multi_reduction <add>, %160, %cst_71 [1] : vector<8x32xf32> to vector<8xf32>
    %166 = vector.shape_cast %165 : vector<8xf32> to vector<8x1xf32>
    %cst_72 = arith.constant 3.200000e+01 : f32
    %167 = vector.broadcast %cst_72 : f32 to vector<8x1xf32>
    %168 = arith.divf %166, %167 : vector<8x1xf32>
    %169 = vector.broadcast %168 : vector<8x1xf32> to vector<8x32xf32>
    %170 = arith.subf %160, %169 : vector<8x32xf32>
    %171 = arith.mulf %170, %170 : vector<8x32xf32>
    %cst_73 = arith.constant dense<0.000000e+00> : vector<8xf32>
    %172 = vector.multi_reduction <add>, %171, %cst_73 [1] : vector<8x32xf32> to vector<8xf32>
    %173 = vector.shape_cast %172 : vector<8xf32> to vector<8x1xf32>
    %cst_74 = arith.constant 3.200000e+01 : f32
    %174 = vector.broadcast %cst_74 : f32 to vector<8x1xf32>
    %175 = arith.divf %173, %174 : vector<8x1xf32>
    %cst_75 = arith.constant 9.99999996E-13 : f32
    %176 = vector.broadcast %cst_75 : f32 to vector<8x1xf32>
    %177 = arith.addf %175, %176 : vector<8x1xf32>
    %178 = math.rsqrt %177 : vector<8x1xf32>
    %179 = vector.broadcast %178 : vector<8x1xf32> to vector<8x32xf32>
    %180 = arith.mulf %170, %179 : vector<8x32xf32>
    %181 = vector.broadcast %163 : vector<1x32xf32> to vector<8x32xf32>
    %182 = arith.mulf %180, %181 : vector<8x32xf32>
    %183 = vector.broadcast %164 : vector<1x32xf32> to vector<8x32xf32>
    %184 = arith.addf %182, %183 : vector<8x32xf32>
    %c1 = arith.constant 1 : index
    %c0_76 = arith.constant 0 : index
    %c0_77 = arith.constant 0 : index
    %185 = vector.load %arg3[%c1, %c0_76, %c0_77] : memref<2x32x96xf32, #tpu.memory_space<vmem>>, vector<1x32x96xf32>
    %186 = vector.shape_cast %185 : vector<1x32x96xf32> to vector<32x96xf32>
    %cst_78 = arith.constant dense<0.000000e+00> : vector<8x96xf32>
    %187 = tpu.matmul %184, %186, %cst_78 {dimension_numbers = #tpu.dot_dimension_numbers<[1], [0], [0], [1], [0, 0, 1, 1], [], []>} : vector<8x32xf32>, vector<32x96xf32>, vector<8x96xf32> -> vector<8x96xf32>
    %c1_79 = arith.constant 1 : index
    %c0_80 = arith.constant 0 : index
    %c0_81 = arith.constant 0 : index
    %188 = vector.load %arg4[%c1_79, %c0_80, %c0_81] : memref<2x1x96xf32, #tpu.memory_space<vmem>>, vector<1x1x96xf32>
    %189 = vector.shape_cast %188 : vector<1x1x96xf32> to vector<1x96xf32>
    %190 = vector.broadcast %189 : vector<1x96xf32> to vector<8x96xf32>
    %191 = arith.addf %187, %190 : vector<8x96xf32>
    %192 = vector.extract_strided_slice %191 {offsets = [0, 0], sizes = [8, 8], strides = [1, 1]} : vector<8x96xf32> to vector<8x8xf32>
    %193 = vector.extract_strided_slice %191 {offsets = [0, 32], sizes = [8, 8], strides = [1, 1]} : vector<8x96xf32> to vector<8x8xf32>
    %194 = vector.extract_strided_slice %191 {offsets = [0, 64], sizes = [8, 8], strides = [1, 1]} : vector<8x96xf32> to vector<8x8xf32>
    %195 = tpu.transpose %193, [1, 0] : vector<8x8xf32> -> vector<8x8xf32>
    %cst_82 = arith.constant dense<0.000000e+00> : vector<8x8xf32>
    %196 = tpu.matmul %192, %195, %cst_82 {dimension_numbers = #tpu.dot_dimension_numbers<[1], [0], [0], [1], [0, 0, 1, 1], [], []>} : vector<8x8xf32>, vector<8x8xf32>, vector<8x8xf32> -> vector<8x8xf32>
    %cst_83 = arith.constant 0.353553385 : f32
    %197 = vector.broadcast %cst_83 : f32 to vector<8x8xf32>
    %198 = arith.mulf %196, %197 : vector<8x8xf32>
    %cst_84 = arith.constant dense<0xFF800000> : vector<8xf32>
    %199 = vector.multi_reduction <maximumf>, %198, %cst_84 [1] : vector<8x8xf32> to vector<8xf32>
    %200 = vector.shape_cast %199 : vector<8xf32> to vector<8x1xf32>
    %201 = vector.broadcast %200 : vector<8x1xf32> to vector<8x8xf32>
    %202 = arith.subf %198, %201 : vector<8x8xf32>
    %203 = math.exp %202 : vector<8x8xf32>
    %cst_85 = arith.constant dense<0.000000e+00> : vector<8xf32>
    %204 = vector.multi_reduction <add>, %203, %cst_85 [1] : vector<8x8xf32> to vector<8xf32>
    %205 = vector.shape_cast %204 : vector<8xf32> to vector<8x1xf32>
    %206 = vector.broadcast %205 : vector<8x1xf32> to vector<8x8xf32>
    %207 = arith.divf %203, %206 : vector<8x8xf32>
    %cst_86 = arith.constant dense<0.000000e+00> : vector<8x8xf32>
    %208 = tpu.matmul %207, %194, %cst_86 {dimension_numbers = #tpu.dot_dimension_numbers<[1], [0], [0], [1], [0, 0, 1, 1], [], []>} : vector<8x8xf32>, vector<8x8xf32>, vector<8x8xf32> -> vector<8x8xf32>
    %209 = vector.extract_strided_slice %191 {offsets = [0, 8], sizes = [8, 8], strides = [1, 1]} : vector<8x96xf32> to vector<8x8xf32>
    %210 = vector.extract_strided_slice %191 {offsets = [0, 40], sizes = [8, 8], strides = [1, 1]} : vector<8x96xf32> to vector<8x8xf32>
    %211 = vector.extract_strided_slice %191 {offsets = [0, 72], sizes = [8, 8], strides = [1, 1]} : vector<8x96xf32> to vector<8x8xf32>
    %212 = tpu.transpose %210, [1, 0] : vector<8x8xf32> -> vector<8x8xf32>
    %cst_87 = arith.constant dense<0.000000e+00> : vector<8x8xf32>
    %213 = tpu.matmul %209, %212, %cst_87 {dimension_numbers = #tpu.dot_dimension_numbers<[1], [0], [0], [1], [0, 0, 1, 1], [], []>} : vector<8x8xf32>, vector<8x8xf32>, vector<8x8xf32> -> vector<8x8xf32>
    %cst_88 = arith.constant 0.353553385 : f32
    %214 = vector.broadcast %cst_88 : f32 to vector<8x8xf32>
    %215 = arith.mulf %213, %214 : vector<8x8xf32>
    %cst_89 = arith.constant dense<0xFF800000> : vector<8xf32>
    %216 = vector.multi_reduction <maximumf>, %215, %cst_89 [1] : vector<8x8xf32> to vector<8xf32>
    %217 = vector.shape_cast %216 : vector<8xf32> to vector<8x1xf32>
    %218 = vector.broadcast %217 : vector<8x1xf32> to vector<8x8xf32>
    %219 = arith.subf %215, %218 : vector<8x8xf32>
    %220 = math.exp %219 : vector<8x8xf32>
    %cst_90 = arith.constant dense<0.000000e+00> : vector<8xf32>
    %221 = vector.multi_reduction <add>, %220, %cst_90 [1] : vector<8x8xf32> to vector<8xf32>
    %222 = vector.shape_cast %221 : vector<8xf32> to vector<8x1xf32>
    %223 = vector.broadcast %222 : vector<8x1xf32> to vector<8x8xf32>
    %224 = arith.divf %220, %223 : vector<8x8xf32>
    %cst_91 = arith.constant dense<0.000000e+00> : vector<8x8xf32>
    %225 = tpu.matmul %224, %211, %cst_91 {dimension_numbers = #tpu.dot_dimension_numbers<[1], [0], [0], [1], [0, 0, 1, 1], [], []>} : vector<8x8xf32>, vector<8x8xf32>, vector<8x8xf32> -> vector<8x8xf32>
    %226 = vector.extract_strided_slice %191 {offsets = [0, 16], sizes = [8, 8], strides = [1, 1]} : vector<8x96xf32> to vector<8x8xf32>
    %227 = vector.extract_strided_slice %191 {offsets = [0, 48], sizes = [8, 8], strides = [1, 1]} : vector<8x96xf32> to vector<8x8xf32>
    %228 = vector.extract_strided_slice %191 {offsets = [0, 80], sizes = [8, 8], strides = [1, 1]} : vector<8x96xf32> to vector<8x8xf32>
    %229 = tpu.transpose %227, [1, 0] : vector<8x8xf32> -> vector<8x8xf32>
    %cst_92 = arith.constant dense<0.000000e+00> : vector<8x8xf32>
    %230 = tpu.matmul %226, %229, %cst_92 {dimension_numbers = #tpu.dot_dimension_numbers<[1], [0], [0], [1], [0, 0, 1, 1], [], []>} : vector<8x8xf32>, vector<8x8xf32>, vector<8x8xf32> -> vector<8x8xf32>
    %cst_93 = arith.constant 0.353553385 : f32
    %231 = vector.broadcast %cst_93 : f32 to vector<8x8xf32>
    %232 = arith.mulf %230, %231 : vector<8x8xf32>
    %cst_94 = arith.constant dense<0xFF800000> : vector<8xf32>
    %233 = vector.multi_reduction <maximumf>, %232, %cst_94 [1] : vector<8x8xf32> to vector<8xf32>
    %234 = vector.shape_cast %233 : vector<8xf32> to vector<8x1xf32>
    %235 = vector.broadcast %234 : vector<8x1xf32> to vector<8x8xf32>
    %236 = arith.subf %232, %235 : vector<8x8xf32>
    %237 = math.exp %236 : vector<8x8xf32>
    %cst_95 = arith.constant dense<0.000000e+00> : vector<8xf32>
    %238 = vector.multi_reduction <add>, %237, %cst_95 [1] : vector<8x8xf32> to vector<8xf32>
    %239 = vector.shape_cast %238 : vector<8xf32> to vector<8x1xf32>
    %240 = vector.broadcast %239 : vector<8x1xf32> to vector<8x8xf32>
    %241 = arith.divf %237, %240 : vector<8x8xf32>
    %cst_96 = arith.constant dense<0.000000e+00> : vector<8x8xf32>
    %242 = tpu.matmul %241, %228, %cst_96 {dimension_numbers = #tpu.dot_dimension_numbers<[1], [0], [0], [1], [0, 0, 1, 1], [], []>} : vector<8x8xf32>, vector<8x8xf32>, vector<8x8xf32> -> vector<8x8xf32>
    %243 = vector.extract_strided_slice %191 {offsets = [0, 24], sizes = [8, 8], strides = [1, 1]} : vector<8x96xf32> to vector<8x8xf32>
    %244 = vector.extract_strided_slice %191 {offsets = [0, 56], sizes = [8, 8], strides = [1, 1]} : vector<8x96xf32> to vector<8x8xf32>
    %245 = vector.extract_strided_slice %191 {offsets = [0, 88], sizes = [8, 8], strides = [1, 1]} : vector<8x96xf32> to vector<8x8xf32>
    %246 = tpu.transpose %244, [1, 0] : vector<8x8xf32> -> vector<8x8xf32>
    %cst_97 = arith.constant dense<0.000000e+00> : vector<8x8xf32>
    %247 = tpu.matmul %243, %246, %cst_97 {dimension_numbers = #tpu.dot_dimension_numbers<[1], [0], [0], [1], [0, 0, 1, 1], [], []>} : vector<8x8xf32>, vector<8x8xf32>, vector<8x8xf32> -> vector<8x8xf32>
    %cst_98 = arith.constant 0.353553385 : f32
    %248 = vector.broadcast %cst_98 : f32 to vector<8x8xf32>
    %249 = arith.mulf %247, %248 : vector<8x8xf32>
    %cst_99 = arith.constant dense<0xFF800000> : vector<8xf32>
    %250 = vector.multi_reduction <maximumf>, %249, %cst_99 [1] : vector<8x8xf32> to vector<8xf32>
    %251 = vector.shape_cast %250 : vector<8xf32> to vector<8x1xf32>
    %252 = vector.broadcast %251 : vector<8x1xf32> to vector<8x8xf32>
    %253 = arith.subf %249, %252 : vector<8x8xf32>
    %254 = math.exp %253 : vector<8x8xf32>
    %cst_100 = arith.constant dense<0.000000e+00> : vector<8xf32>
    %255 = vector.multi_reduction <add>, %254, %cst_100 [1] : vector<8x8xf32> to vector<8xf32>
    %256 = vector.shape_cast %255 : vector<8xf32> to vector<8x1xf32>
    %257 = vector.broadcast %256 : vector<8x1xf32> to vector<8x8xf32>
    %258 = arith.divf %254, %257 : vector<8x8xf32>
    %cst_101 = arith.constant dense<0.000000e+00> : vector<8x8xf32>
    %259 = tpu.matmul %258, %245, %cst_101 {dimension_numbers = #tpu.dot_dimension_numbers<[1], [0], [0], [1], [0, 0, 1, 1], [], []>} : vector<8x8xf32>, vector<8x8xf32>, vector<8x8xf32> -> vector<8x8xf32>
    %260 = tpu.concatenate %208, %225, %242, %259 in 1 : vector<8x8xf32>, vector<8x8xf32>, vector<8x8xf32>, vector<8x8xf32> -> vector<8x32xf32>
    %c1_102 = arith.constant 1 : index
    %c0_103 = arith.constant 0 : index
    %c0_104 = arith.constant 0 : index
    %261 = vector.load %arg5[%c1_102, %c0_103, %c0_104] : memref<2x32x32xf32, #tpu.memory_space<vmem>>, vector<1x32x32xf32>
    %262 = vector.shape_cast %261 : vector<1x32x32xf32> to vector<32x32xf32>
    %cst_105 = arith.constant dense<0.000000e+00> : vector<8x32xf32>
    %263 = tpu.matmul %260, %262, %cst_105 {dimension_numbers = #tpu.dot_dimension_numbers<[1], [0], [0], [1], [0, 0, 1, 1], [], []>} : vector<8x32xf32>, vector<32x32xf32>, vector<8x32xf32> -> vector<8x32xf32>
    %c1_106 = arith.constant 1 : index
    %c0_107 = arith.constant 0 : index
    %c0_108 = arith.constant 0 : index
    %264 = vector.load %arg6[%c1_106, %c0_107, %c0_108] : memref<2x1x32xf32, #tpu.memory_space<vmem>>, vector<1x1x32xf32>
    %265 = vector.shape_cast %264 : vector<1x1x32xf32> to vector<1x32xf32>
    %266 = vector.broadcast %265 : vector<1x32xf32> to vector<8x32xf32>
    %267 = arith.addf %263, %266 : vector<8x32xf32>
    %268 = arith.addf %184, %267 : vector<8x32xf32>
    %c1_109 = arith.constant 1 : index
    %c0_110 = arith.constant 0 : index
    %c0_111 = arith.constant 0 : index
    %269 = vector.load %arg7[%c1_109, %c0_110, %c0_111] : memref<2x2x32xf32, #tpu.memory_space<vmem>>, vector<1x2x32xf32>
    %270 = vector.shape_cast %269 : vector<1x2x32xf32> to vector<2x32xf32>
    %271 = vector.extract_strided_slice %270 {offsets = [0, 0], sizes = [1, 32], strides = [1, 1]} : vector<2x32xf32> to vector<1x32xf32>
    %272 = vector.extract_strided_slice %270 {offsets = [1, 0], sizes = [1, 32], strides = [1, 1]} : vector<2x32xf32> to vector<1x32xf32>
    %cst_112 = arith.constant dense<0.000000e+00> : vector<8xf32>
    %273 = vector.multi_reduction <add>, %268, %cst_112 [1] : vector<8x32xf32> to vector<8xf32>
    %274 = vector.shape_cast %273 : vector<8xf32> to vector<8x1xf32>
    %cst_113 = arith.constant 3.200000e+01 : f32
    %275 = vector.broadcast %cst_113 : f32 to vector<8x1xf32>
    %276 = arith.divf %274, %275 : vector<8x1xf32>
    %277 = vector.broadcast %276 : vector<8x1xf32> to vector<8x32xf32>
    %278 = arith.subf %268, %277 : vector<8x32xf32>
    %279 = arith.mulf %278, %278 : vector<8x32xf32>
    %cst_114 = arith.constant dense<0.000000e+00> : vector<8xf32>
    %280 = vector.multi_reduction <add>, %279, %cst_114 [1] : vector<8x32xf32> to vector<8xf32>
    %281 = vector.shape_cast %280 : vector<8xf32> to vector<8x1xf32>
    %cst_115 = arith.constant 3.200000e+01 : f32
    %282 = vector.broadcast %cst_115 : f32 to vector<8x1xf32>
    %283 = arith.divf %281, %282 : vector<8x1xf32>
    %cst_116 = arith.constant 9.99999996E-13 : f32
    %284 = vector.broadcast %cst_116 : f32 to vector<8x1xf32>
    %285 = arith.addf %283, %284 : vector<8x1xf32>
    %286 = math.rsqrt %285 : vector<8x1xf32>
    %287 = vector.broadcast %286 : vector<8x1xf32> to vector<8x32xf32>
    %288 = arith.mulf %278, %287 : vector<8x32xf32>
    %289 = vector.broadcast %271 : vector<1x32xf32> to vector<8x32xf32>
    %290 = arith.mulf %288, %289 : vector<8x32xf32>
    %291 = vector.broadcast %272 : vector<1x32xf32> to vector<8x32xf32>
    %292 = arith.addf %290, %291 : vector<8x32xf32>
    %c1_117 = arith.constant 1 : index
    %c0_118 = arith.constant 0 : index
    %c0_119 = arith.constant 0 : index
    %293 = vector.load %arg8[%c1_117, %c0_118, %c0_119] : memref<2x32x64xf32, #tpu.memory_space<vmem>>, vector<1x32x64xf32>
    %294 = vector.shape_cast %293 : vector<1x32x64xf32> to vector<32x64xf32>
    %cst_120 = arith.constant dense<0.000000e+00> : vector<8x64xf32>
    %295 = tpu.matmul %292, %294, %cst_120 {dimension_numbers = #tpu.dot_dimension_numbers<[1], [0], [0], [1], [0, 0, 1, 1], [], []>} : vector<8x32xf32>, vector<32x64xf32>, vector<8x64xf32> -> vector<8x64xf32>
    %c1_121 = arith.constant 1 : index
    %c0_122 = arith.constant 0 : index
    %c0_123 = arith.constant 0 : index
    %296 = vector.load %arg9[%c1_121, %c0_122, %c0_123] : memref<2x1x64xf32, #tpu.memory_space<vmem>>, vector<1x1x64xf32>
    %297 = vector.shape_cast %296 : vector<1x1x64xf32> to vector<1x64xf32>
    %298 = vector.broadcast %297 : vector<1x64xf32> to vector<8x64xf32>
    %299 = arith.addf %295, %298 : vector<8x64xf32>
    %cst_124 = arith.constant 5.000000e-01 : f32
    %300 = vector.broadcast %cst_124 : f32 to vector<8x64xf32>
    %301 = arith.mulf %300, %299 : vector<8x64xf32>
    %cst_125 = arith.constant 4.471500e-02 : f32
    %302 = vector.broadcast %cst_125 : f32 to vector<8x64xf32>
    %303 = arith.mulf %302, %299 : vector<8x64xf32>
    %304 = arith.mulf %303, %299 : vector<8x64xf32>
    %305 = arith.mulf %304, %299 : vector<8x64xf32>
    %306 = arith.addf %299, %305 : vector<8x64xf32>
    %cst_126 = arith.constant 0.797884583 : f32
    %307 = vector.broadcast %cst_126 : f32 to vector<8x64xf32>
    %308 = arith.mulf %307, %306 : vector<8x64xf32>
    %309 = math.tanh %308 : vector<8x64xf32>
    %cst_127 = arith.constant 1.000000e+00 : f32
    %310 = vector.broadcast %cst_127 : f32 to vector<8x64xf32>
    %311 = arith.addf %310, %309 : vector<8x64xf32>
    %312 = arith.mulf %301, %311 : vector<8x64xf32>
    %c1_128 = arith.constant 1 : index
    %c0_129 = arith.constant 0 : index
    %c0_130 = arith.constant 0 : index
    %313 = vector.load %arg10[%c1_128, %c0_129, %c0_130] : memref<2x64x32xf32, #tpu.memory_space<vmem>>, vector<1x64x32xf32>
    %314 = vector.shape_cast %313 : vector<1x64x32xf32> to vector<64x32xf32>
    %cst_131 = arith.constant dense<0.000000e+00> : vector<8x32xf32>
    %315 = tpu.matmul %312, %314, %cst_131 {dimension_numbers = #tpu.dot_dimension_numbers<[1], [0], [0], [1], [0, 0, 1, 1], [], []>} : vector<8x64xf32>, vector<64x32xf32>, vector<8x32xf32> -> vector<8x32xf32>
    %c1_132 = arith.constant 1 : index
    %c0_133 = arith.constant 0 : index
    %c0_134 = arith.constant 0 : index
    %316 = vector.load %arg11[%c1_132, %c0_133, %c0_134] : memref<2x1x32xf32, #tpu.memory_space<vmem>>, vector<1x1x32xf32>
    %317 = vector.shape_cast %316 : vector<1x1x32xf32> to vector<1x32xf32>
    %318 = vector.broadcast %317 : vector<1x32xf32> to vector<8x32xf32>
    %319 = arith.addf %315, %318 : vector<8x32xf32>
    %320 = arith.addf %292, %319 : vector<8x32xf32>
    %c1_135 = arith.constant 1 : index
    %c0_136 = arith.constant 0 : index
    %c0_137 = arith.constant 0 : index
    %321 = vector.load %arg12[%c1_135, %c0_136, %c0_137] : memref<2x2x32xf32, #tpu.memory_space<vmem>>, vector<1x2x32xf32>
    %322 = vector.shape_cast %321 : vector<1x2x32xf32> to vector<2x32xf32>
    %323 = vector.extract_strided_slice %322 {offsets = [0, 0], sizes = [1, 32], strides = [1, 1]} : vector<2x32xf32> to vector<1x32xf32>
    %324 = vector.extract_strided_slice %322 {offsets = [1, 0], sizes = [1, 32], strides = [1, 1]} : vector<2x32xf32> to vector<1x32xf32>
    %cst_138 = arith.constant dense<0.000000e+00> : vector<8xf32>
    %325 = vector.multi_reduction <add>, %320, %cst_138 [1] : vector<8x32xf32> to vector<8xf32>
    %326 = vector.shape_cast %325 : vector<8xf32> to vector<8x1xf32>
    %cst_139 = arith.constant 3.200000e+01 : f32
    %327 = vector.broadcast %cst_139 : f32 to vector<8x1xf32>
    %328 = arith.divf %326, %327 : vector<8x1xf32>
    %329 = vector.broadcast %328 : vector<8x1xf32> to vector<8x32xf32>
    %330 = arith.subf %320, %329 : vector<8x32xf32>
    %331 = arith.mulf %330, %330 : vector<8x32xf32>
    %cst_140 = arith.constant dense<0.000000e+00> : vector<8xf32>
    %332 = vector.multi_reduction <add>, %331, %cst_140 [1] : vector<8x32xf32> to vector<8xf32>
    %333 = vector.shape_cast %332 : vector<8xf32> to vector<8x1xf32>
    %cst_141 = arith.constant 3.200000e+01 : f32
    %334 = vector.broadcast %cst_141 : f32 to vector<8x1xf32>
    %335 = arith.divf %333, %334 : vector<8x1xf32>
    %cst_142 = arith.constant 9.99999996E-13 : f32
    %336 = vector.broadcast %cst_142 : f32 to vector<8x1xf32>
    %337 = arith.addf %335, %336 : vector<8x1xf32>
    %338 = math.rsqrt %337 : vector<8x1xf32>
    %339 = vector.broadcast %338 : vector<8x1xf32> to vector<8x32xf32>
    %340 = arith.mulf %330, %339 : vector<8x32xf32>
    %341 = vector.broadcast %323 : vector<1x32xf32> to vector<8x32xf32>
    %342 = arith.mulf %340, %341 : vector<8x32xf32>
    %343 = vector.broadcast %324 : vector<1x32xf32> to vector<8x32xf32>
    %344 = arith.addf %342, %343 : vector<8x32xf32>
    %345 = vector.extract_strided_slice %344 {offsets = [0, 0], sizes = [1, 32], strides = [1, 1]} : vector<8x32xf32> to vector<1x32xf32>
    %c0_143 = arith.constant 0 : index
    %c0_144 = arith.constant 0 : index
    %346 = vector.load %arg13[%c0_143, %c0_144] : memref<32x32xf32, #tpu.memory_space<vmem>>, vector<32x32xf32>
    %cst_145 = arith.constant dense<0.000000e+00> : vector<1x32xf32>
    %347 = tpu.matmul %345, %346, %cst_145 {dimension_numbers = #tpu.dot_dimension_numbers<[1], [0], [0], [1], [0, 0, 1, 1], [], []>} : vector<1x32xf32>, vector<32x32xf32>, vector<1x32xf32> -> vector<1x32xf32>
    %c0_146 = arith.constant 0 : index
    %c0_147 = arith.constant 0 : index
    %348 = vector.load %arg14[%c0_146, %c0_147] : memref<1x32xf32, #tpu.memory_space<vmem>>, vector<1x32xf32>
    %349 = arith.addf %347, %348 : vector<1x32xf32>
    %350 = math.tanh %349 : vector<1x32xf32>
    %c0_148 = arith.constant 0 : index
    %c0_149 = arith.constant 0 : index
    %351 = vector.load %arg15[%c0_148, %c0_149] : memref<32x128xf32, #tpu.memory_space<vmem>>, vector<32x128xf32>
    %cst_150 = arith.constant dense<0.000000e+00> : vector<1x128xf32>
    %352 = tpu.matmul %350, %351, %cst_150 {dimension_numbers = #tpu.dot_dimension_numbers<[1], [0], [0], [1], [0, 0, 1, 1], [], []>} : vector<1x32xf32>, vector<32x128xf32>, vector<1x128xf32> -> vector<1x128xf32>
    %c0_151 = arith.constant 0 : index
    %c0_152 = arith.constant 0 : index
    %353 = vector.load %arg16[%c0_151, %c0_152] : memref<1x128xf32, #tpu.memory_space<vmem>>, vector<1x128xf32>
    %354 = arith.addf %352, %353 : vector<1x128xf32>
    %c0_153 = arith.constant 0 : index
    %c0_154 = arith.constant 0 : index
    %c0_155 = arith.constant 0 : index
    %355 = vector.load %arg17[%c0_153, %c0_154, %c0_155] : memref<1x1x128xf32, #tpu.memory_space<vmem>>, vector<1x1x128xf32>
    %356 = vector.shape_cast %355 : vector<1x1x128xf32> to vector<1x128xf32>
    %cst_156 = arith.constant 5.000000e-01 : f32
    %357 = vector.broadcast %cst_156 : f32 to vector<1x128xf32>
    %358 = arith.cmpf oge, %356, %357 : vector<1x128xf32>
    %cst_157 = arith.constant 2.000000e+00 : f32
    %359 = vector.broadcast %cst_157 : f32 to vector<1x128xf32>
    %360 = arith.mulf %354, %359 : vector<1x128xf32>
    %cst_158 = arith.constant 0.000000e+00 : f32
    %361 = vector.broadcast %cst_158 : f32 to vector<1x128xf32>
    %362 = arith.select %358, %360, %361 : vector<1x128xi1>, vector<1x128xf32>
    %c0_159 = arith.constant 0 : index
    %c0_160 = arith.constant 0 : index
    %c0_161 = arith.constant 0 : index
    %363 = vector.load %arg18[%c0_159, %c0_160, %c0_161] : memref<1x1x128xf32, #tpu.memory_space<vmem>>, vector<1x1x128xf32>
    %364 = vector.shape_cast %363 : vector<1x1x128xf32> to vector<1x128xf32>
    %365 = vector.shape_cast %362 : vector<1x128xf32> to vector<1x1x128xf32>
    tpu.vector_store %arg18[%c0_159, %c0_160, %c0_161], %365 {strides = array<i32>} : memref<1x1x128xf32, #tpu.memory_space<vmem>>, vector<1x1x128xf32>,
    return
  }
  func.func @transform_0(%arg0: i32) -> (i32, i32, i32) {
    %c0_i32 = arith.constant 0 : i32
    %c0_i32_0 = arith.constant 0 : i32
    %c0_i32_1 = arith.constant 0 : i32
    return %arg0, %c0_i32, %c0_i32_0 : i32, i32, i32
  }
  func.func @transform_1(%arg0: i32) -> (i32, i32) {
    %c0_i32 = arith.constant 0 : i32
    %c0_i32_0 = arith.constant 0 : i32
    %c0_i32_1 = arith.constant 0 : i32
    return %c0_i32, %c0_i32_0 : i32, i32
  }
  func.func @transform_2(%arg0: i32) -> (i32, i32, i32) {
    %c0_i32 = arith.constant 0 : i32
    %c0_i32_0 = arith.constant 0 : i32
    %c0_i32_1 = arith.constant 0 : i32
    %c0_i32_2 = arith.constant 0 : i32
    return %c0_i32, %c0_i32_0, %c0_i32_1 : i32, i32, i32
  }
  func.func @transform_3(%arg0: i32) -> (i32, i32, i32) {
    %c0_i32 = arith.constant 0 : i32
    %c0_i32_0 = arith.constant 0 : i32
    %c0_i32_1 = arith.constant 0 : i32
    %c0_i32_2 = arith.constant 0 : i32
    return %c0_i32, %c0_i32_0, %c0_i32_1 : i32, i32, i32
  }
  func.func @transform_4(%arg0: i32) -> (i32, i32, i32) {
    %c0_i32 = arith.constant 0 : i32
    %c0_i32_0 = arith.constant 0 : i32
    %c0_i32_1 = arith.constant 0 : i32
    %c0_i32_2 = arith.constant 0 : i32
    return %c0_i32, %c0_i32_0, %c0_i32_1 : i32, i32, i32
  }
  func.func @transform_5(%arg0: i32) -> (i32, i32, i32) {
    %c0_i32 = arith.constant 0 : i32
    %c0_i32_0 = arith.constant 0 : i32
    %c0_i32_1 = arith.constant 0 : i32
    %c0_i32_2 = arith.constant 0 : i32
    return %c0_i32, %c0_i32_0, %c0_i32_1 : i32, i32, i32
  }
  func.func @transform_6(%arg0: i32) -> (i32, i32, i32) {
    %c0_i32 = arith.constant 0 : i32
    %c0_i32_0 = arith.constant 0 : i32
    %c0_i32_1 = arith.constant 0 : i32
    %c0_i32_2 = arith.constant 0 : i32
    return %c0_i32, %c0_i32_0, %c0_i32_1 : i32, i32, i32
  }
  func.func @transform_7(%arg0: i32) -> (i32, i32, i32) {
    %c0_i32 = arith.constant 0 : i32
    %c0_i32_0 = arith.constant 0 : i32
    %c0_i32_1 = arith.constant 0 : i32
    %c0_i32_2 = arith.constant 0 : i32
    return %c0_i32, %c0_i32_0, %c0_i32_1 : i32, i32, i32
  }
  func.func @transform_8(%arg0: i32) -> (i32, i32, i32) {
    %c0_i32 = arith.constant 0 : i32
    %c0_i32_0 = arith.constant 0 : i32
    %c0_i32_1 = arith.constant 0 : i32
    %c0_i32_2 = arith.constant 0 : i32
    return %c0_i32, %c0_i32_0, %c0_i32_1 : i32, i32, i32
  }
  func.func @transform_9(%arg0: i32) -> (i32, i32, i32) {
    %c0_i32 = arith.constant 0 : i32
    %c0_i32_0 = arith.constant 0 : i32
    %c0_i32_1 = arith.constant 0 : i32
    %c0_i32_2 = arith.constant 0 : i32
    return %c0_i32, %c0_i32_0, %c0_i32_1 : i32, i32, i32
  }
  func.func @transform_10(%arg0: i32) -> (i32, i32, i32) {
    %c0_i32 = arith.constant 0 : i32
    %c0_i32_0 = arith.constant 0 : i32
    %c0_i32_1 = arith.constant 0 : i32
    %c0_i32_2 = arith.constant 0 : i32
    return %c0_i32, %c0_i32_0, %c0_i32_1 : i32, i32, i32
  }
  func.func @transform_11(%arg0: i32) -> (i32, i32, i32) {
    %c0_i32 = arith.constant 0 : i32
    %c0_i32_0 = arith.constant 0 : i32
    %c0_i32_1 = arith.constant 0 : i32
    %c0_i32_2 = arith.constant 0 : i32
    return %c0_i32, %c0_i32_0, %c0_i32_1 : i32, i32, i32
  }
  func.func @transform_12(%arg0: i32) -> (i32, i32) {
    %c0_i32 = arith.constant 0 : i32
    %c0_i32_0 = arith.constant 0 : i32
    %c0_i32_1 = arith.constant 0 : i32
    return %c0_i32, %c0_i32_0 : i32, i32
  }
  func.func @transform_13(%arg0: i32) -> (i32, i32) {
    %c0_i32 = arith.constant 0 : i32
    %c0_i32_0 = arith.constant 0 : i32
    %c0_i32_1 = arith.constant 0 : i32
    return %c0_i32, %c0_i32_0 : i32, i32
  }
  func.func @transform_14(%arg0: i32) -> (i32, i32) {
    %c0_i32 = arith.constant 0 : i32
    %c0_i32_0 = arith.constant 0 : i32
    %c0_i32_1 = arith.constant 0 : i32
    return %c0_i32, %c0_i32_0 : i32, i32
  }
  func.func @transform_15(%arg0: i32) -> (i32, i32) {
    %c0_i32 = arith.constant 0 : i32
    %c0_i32_0 = arith.constant 0 : i32
    %c0_i32_1 = arith.constant 0 : i32
    return %c0_i32, %c0_i32_0 : i32, i32
  }
  func.func @transform_16(%arg0: i32) -> (i32, i32, i32) {
    %c0_i32 = arith.constant 0 : i32
    %c0_i32_0 = arith.constant 0 : i32
    %c0_i32_1 = arith.constant 0 : i32
    return %arg0, %c0_i32, %c0_i32_0 : i32, i32, i32
  }
  func.func @transform_17(%arg0: i32) -> (i32, i32, i32) {
    %c0_i32 = arith.constant 0 : i32
    %c0_i32_0 = arith.constant 0 : i32
    %c0_i32_1 = arith.constant 0 : i32
    return %arg0, %c0_i32, %c0_i32_0 : i32, i32, i32
  }
}

</mosaic_0001>

<llo_original>
// kernel: tpu_custom_call.1
$region0: #{tpu_custom_call.1}
  #allocation0 [shape = 'u32[]', space=smem, size = 0x4, offset = 0x4, fixed_abs, tag = 'smem constant byte address 0x4 - core index']
  #allocation1 [shape = 'u32[72,128]{1,0:T(1,128)}', space=vmem, size = 0x9000, scoped, tag = 'internal scratch']
  %s0 = inlined_call_operand.hbm [shape: f32[2,8,32], index: 0, kind: input, shape index: {}]
  %s1 = inlined_call_operand.hbm [shape: f32[2,32], index: 1, kind: input, shape index: {}]
  %s2 = inlined_call_operand.vmem [shape: f32[2,32,96], index: 2, kind: input, shape index: {}]
  %s3 = inlined_call_operand.hbm [shape: f32[2,1,96], index: 3, kind: input, shape index: {}]
  %s4 = inlined_call_operand.vmem [shape: f32[2,32,32], index: 4, kind: input, shape index: {}]
  %s5 = inlined_call_operand.hbm [shape: f32[2,1,32], index: 5, kind: input, shape index: {}]
  %s6 = inlined_call_operand.vmem [shape: f32[2,2,32], index: 6, kind: input, shape index: {}]
  %s7 = inlined_call_operand.vmem [shape: f32[2,32,64], index: 7, kind: input, shape index: {}]
  %s8 = inlined_call_operand.hbm [shape: f32[2,1,64], index: 8, kind: input, shape index: {}]
  %s9 = inlined_call_operand.vmem [shape: f32[2,64,32], index: 9, kind: input, shape index: {}]
  %s10 = inlined_call_operand.hbm [shape: f32[2,1,32], index: 10, kind: input, shape index: {}]
  %s11 = inlined_call_operand.vmem [shape: f32[2,2,32], index: 11, kind: input, shape index: {}]
  %s12 = inlined_call_operand.hbm [shape: f32[32,32], index: 12, kind: input, shape index: {}]
  %s13 = inlined_call_operand.vmem [shape: f32[1,32], index: 13, kind: input, shape index: {}]
  %s14 = inlined_call_operand.hbm [shape: f32[32,128], index: 14, kind: input, shape index: {}]
  %s15 = inlined_call_operand.vmem [shape: f32[1,128], index: 15, kind: input, shape index: {}]
  %s16 = inlined_call_operand.vmem [shape: f32[2,1,128], index: 16, kind: input, shape index: {}]
  %s17 = inlined_call_operand.hbm [shape: f32[2,1,128], index: 17, kind: output, shape index: {}]
  %s18 = sld [smem:[#allocation0]]
  $region133: #{tpu_custom_call.1} parent=0
    _
  %s20 = ssub.s32 1, %s18
  %s21 = scalar_select 0, %s20, %s18
  $region1: #{tpu_custom_call.1} parent=0
    #allocation2 [shape = 'u8[8192]{0}', space=vmem, size = 0x2000, scoped, tag = 'input window, operand 0']
    #allocation3 [shape = 's32[2]{0}', space=sflag, size = 0x8, scoped, tag = 'scoped memory for tpu_custom_call.1']
    #allocation4 [shape = 's32[2]{0}', space=sflag, size = 0x8, scoped, tag = 'scoped memory for tpu_custom_call.1']
    #allocation5 [shape = 'u8[1024]{0}', space=vmem, size = 0x400, scoped, tag = 'input window, operand 1, single buffered']
    #allocation6 [shape = 's32[1]{0}', space=sflag, size = 0x4, scoped, tag = 'scoped memory for tpu_custom_call.1']
    #allocation7 [shape = 'u8[1024]{0}', space=vmem, size = 0x400, scoped, tag = 'input window, operand 3, single buffered']
    #allocation8 [shape = 'u8[1024]{0}', space=vmem, size = 0x400, scoped, tag = 'input window, operand 5, single buffered']
    #allocation9 [shape = 's32[1]{0}', space=sflag, size = 0x4, scoped, tag = 'scoped memory for tpu_custom_call.1']
    #allocation10 [shape = 'u8[1024]{0}', space=vmem, size = 0x400, scoped, tag = 'input window, operand 8, single buffered']
    #allocation11 [shape = 'u8[1024]{0}', space=vmem, size = 0x400, scoped, tag = 'input window, operand 10, single buffered']
    #allocation12 [shape = 's32[1]{0}', space=sflag, size = 0x4, scoped, tag = 'scoped memory for tpu_custom_call.1']
    #allocation13 [shape = 'u8[16384]{0}', space=vmem, size = 0x4000, scoped, tag = 'input window, operand 12, single buffered']
    #allocation14 [shape = 'u8[16384]{0}', space=vmem, size = 0x4000, scoped, tag = 'input window, operand 14, single buffered']
    #allocation15 [shape = 's32[1]{0}', space=sflag, size = 0x4, scoped, tag = 'scoped memory for tpu_custom_call.1']
    #allocation16 [shape = 'u8[1024]{0}', space=vmem, size = 0x400, scoped, tag = 'output window, operand 0']
    %22 = vsyncpa [#allocation3], 0
    %s23 = scalar_lea.sflag [#allocation3], 1
    %24 = vsyncpa %s23, 0
    %25 = vsyncpa [#allocation6], 0
    %26 = vsyncpa [#allocation9], 0
    %27 = vsyncpa [#allocation12], 0
    %28 = vsyncpa [#allocation15], 0
    %29 = vsyncpa [#allocation4], 0
    %s30 = scalar_lea.sflag [#allocation4], 1
    %31 = vsyncpa %s30, 0
    loop: start=0, step=1, limit=4
    $region2: #{tpu_custom_call.1} parent=1 // loop_pre_header
      _
    $region3: #{tpu_custom_call.1} parent=1 // loop_header
      %s33 = sphi 0, %s37
      %p34 = scmp.ge.s32.totalorder %s33, 4
      %s43 = sphi 0, %s45
      %s46 = sphi 0, %s43
      %s47 = sphi 0, %s46
      %s63 = sphi 0, %s47
      %s67 = sphi 0, %s67
      %s69 = sphi 0, %s67
      %s70 = sphi 0, %s69
      %s84 = sphi 0, %s70
      %s88 = sphi 0, %s88
      %s90 = sphi 0, %s88
      %s91 = sphi 0, %s90
      %s105 = sphi 0, %s91
      %s109 = sphi 0, %s109
      %s111 = sphi 0, %s109
      %s112 = sphi 0, %s111
      %s126 = sphi 0, %s112
      %s130 = sphi 0, %s130
      %s132 = sphi 0, %s130
      %s133 = sphi 0, %s132
      %s147 = sphi 0, %s133
      %s151 = sphi 0, %s151
      %s153 = sphi 0, %s151
      %s154 = sphi 0, %s153
      %s168 = sphi 0, %s154
      %s172 = sphi 0, %s172
      %s174 = sphi 0, %s172
      %s175 = sphi 0, %s174
      %s189 = sphi 0, %s175
      %s193 = sphi 0, %s193
      %s195 = sphi 0, %s193
      %s196 = sphi 0, %s195
      %s210 = sphi 0, %s196
      %s214 = sphi 0, %s214
      %s216 = sphi 0, %s214
      %s217 = sphi 0, %s216
      %s231 = sphi 0, %s217
      %s235 = sphi 0, %s235
      %s237 = sphi 0, %s235
      %s238 = sphi 0, %s237
      %s252 = sphi 0, %s238
      %s256 = sphi 0, %s256
      %s258 = sphi 0, %s256
      %s259 = sphi 0, %s258
      %s273 = sphi 0, %s259
      %s277 = sphi 0, %s277
      %s279 = sphi 0, %s277
      %s280 = sphi 0, %s279
      %s294 = sphi 0, %s280
      %s298 = sphi 0, %s298
      %s300 = sphi 0, %s298
      %s301 = sphi 0, %s300
      %s315 = sphi 0, %s301
      %s319 = sphi 0, %s319
      %s321 = sphi 0, %s319
      %s322 = sphi 0, %s321
      %s336 = sphi 0, %s322
      %s340 = sphi 0, %s340
      %s342 = sphi 0, %s340
      %s343 = sphi 0, %s342
      %s357 = sphi 0, %s343
      %s361 = sphi 0, %s361
      %s363 = sphi 0, %s361
      %s364 = sphi 0, %s363
      %s378 = sphi 0, %s364
      %s384 = sphi 0, %s386
      %s387 = sphi 0, %s384
      %s388 = sphi 0, %s387
      %s404 = sphi 0, %s388
      %s410 = sphi 0, %s412
      %s413 = sphi 0, %s410
      %s414 = sphi 0, %s413
      %s430 = sphi 0, %s414
    $region4: #{tpu_custom_call.1} parent=1 // loop_header_branch
      %36 = sbr.rel (%p34) target = $region8
    $region5: #{tpu_custom_call.1} parent=1 // loop_body
      %s38 = ssub.s32 %s33, 1
      %s39 = ssub.s32 %s33, 2
      %s40 = sadd.s32 %s33, 1
      %s41 = ssub.s32 %s33, %s40
      %p42 = scmp.eq.s32.totalorder %s41, 0
      %s44 = sadd.s32 %s43, 1
      %s45 = scalar_select %p42, %s43, %s44
      %p48 = pneg %p42
      %p49 = scmp.eq.s32.totalorder %s33, 1
      %p50 = por %p48, %p49
      %p51 = scmp.ne.s32.totalorder %s43, %s46
      %p52 = scmp.eq.s32.totalorder %s33, 0
      %p53 = por %p51, %p52
      %p54 = scmp.ne.s32.totalorder %s43, %s46
      %p55 = scmp.eq.s32.totalorder %s38, 1
      %p56 = por %p54, %p55
      %p57 = scmp.ne.s32.totalorder %s46, %s47
      %p58 = scmp.eq.s32.totalorder %s38, 0
      %p59 = por %p57, %p58
      %p60 = scmp.ne.s32.totalorder %s46, %s47
      %p61 = scmp.eq.s32.totalorder %s39, 1
      %p62 = por %p60, %p61
      %p64 = scmp.ne.s32.totalorder %s47, %s63
      %p65 = scmp.eq.s32.totalorder %s39, 0
      %p66 = por %p64, %p65
      %s68 = sadd.s32 %s67, 1
      %p71 = scmp.eq.s32.totalorder %s33, 1
      %p72 = scmp.ne.s32.totalorder %s67, %s69
      %p73 = scmp.eq.s32.totalorder %s33, 0
      %p74 = por %p72, %p73
      %p75 = scmp.ne.s32.totalorder %s67, %s69
      %p76 = scmp.eq.s32.totalorder %s38, 1
      %p77 = por %p75, %p76
      %p78 = scmp.ne.s32.totalorder %s69, %s70
      %p79 = scmp.eq.s32.totalorder %s38, 0
      %p80 = por %p78, %p79
      %p81 = scmp.ne.s32.totalorder %s69, %s70
      %p82 = scmp.eq.s32.totalorder %s39, 1
      %p83 = por %p81, %p82
      %p85 = scmp.ne.s32.totalorder %s70, %s84
      %p86 = scmp.eq.s32.totalorder %s39, 0
      %p87 = por %p85, %p86
      %s89 = sadd.s32 %s88, 1
      %p92 = scmp.eq.s32.totalorder %s33, 1
      %p93 = scmp.ne.s32.totalorder %s88, %s90
      %p94 = scmp.eq.s32.totalorder %s33, 0
      %p95 = por %p93, %p94
      %p96 = scmp.ne.s32.totalorder %s88, %s90
      %p97 = scmp.eq.s32.totalorder %s38, 1
      %p98 = por %p96, %p97
      %p99 = scmp.ne.s32.totalorder %s90, %s91
      %p100 = scmp.eq.s32.totalorder %s38, 0
      %p101 = por %p99, %p100
      %p102 = scmp.ne.s32.totalorder %s90, %s91
      %p103 = scmp.eq.s32.totalorder %s39, 1
      %p104 = por %p102, %p103
      %p106 = scmp.ne.s32.totalorder %s91, %s105
      %p107 = scmp.eq.s32.totalorder %s39, 0
      %p108 = por %p106, %p107
      %s110 = sadd.s32 %s109, 1
      %p113 = scmp.eq.s32.totalorder %s33, 1
      %p114 = scmp.ne.s32.totalorder %s109, %s111
      %p115 = scmp.eq.s32.totalorder %s33, 0
      %p116 = por %p114, %p115
      %p117 = scmp.ne.s32.totalorder %s109, %s111
      %p118 = scmp.eq.s32.totalorder %s38, 1
      %p119 = por %p117, %p118
      %p120 = scmp.ne.s32.totalorder %s111, %s112
      %p121 = scmp.eq.s32.totalorder %s38, 0
      %p122 = por %p120, %p121
      %p123 = scmp.ne.s32.totalorder %s111, %s112
      %p124 = scmp.eq.s32.totalorder %s39, 1
      %p125 = por %p123, %p124
      %p127 = scmp.ne.s32.totalorder %s112, %s126
      %p128 = scmp.eq.s32.totalorder %s39, 0
      %p129 = por %p127, %p128
      %s131 = sadd.s32 %s130, 1
      %p134 = scmp.eq.s32.totalorder %s33, 1
      %p135 = scmp.ne.s32.totalorder %s130, %s132
      %p136 = scmp.eq.s32.totalorder %s33, 0
      %p137 = por %p135, %p136
      %p138 = scmp.ne.s32.totalorder %s130, %s132
      %p139 = scmp.eq.s32.totalorder %s38, 1
      %p140 = por %p138, %p139
      %p141 = scmp.ne.s32.totalorder %s132, %s133
      %p142 = scmp.eq.s32.totalorder %s38, 0
      %p143 = por %p141, %p142
      %p144 = scmp.ne.s32.totalorder %s132, %s133
      %p145 = scmp.eq.s32.totalorder %s39, 1
      %p146 = por %p144, %p145
      %p148 = scmp.ne.s32.totalorder %s133, %s147
      %p149 = scmp.eq.s32.totalorder %s39, 0
      %p150 = por %p148, %p149
      %s152 = sadd.s32 %s151, 1
      %p155 = scmp.eq.s32.totalorder %s33, 1
      %p156 = scmp.ne.s32.totalorder %s151, %s153
      %p157 = scmp.eq.s32.totalorder %s33, 0
      %p158 = por %p156, %p157
      %p159 = scmp.ne.s32.totalorder %s151, %s153
      %p160 = scmp.eq.s32.totalorder %s38, 1
      %p161 = por %p159, %p160
      %p162 = scmp.ne.s32.totalorder %s153, %s154
      %p163 = scmp.eq.s32.totalorder %s38, 0
      %p164 = por %p162, %p163
      %p165 = scmp.ne.s32.totalorder %s153, %s154
      %p166 = scmp.eq.s32.totalorder %s39, 1
      %p167 = por %p165, %p166
      %p169 = scmp.ne.s32.totalorder %s154, %s168
      %p170 = scmp.eq.s32.totalorder %s39, 0
      %p171 = por %p169, %p170
      %s173 = sadd.s32 %s172, 1
      %p176 = scmp.eq.s32.totalorder %s33, 1
      %p177 = scmp.ne.s32.totalorder %s172, %s174
      %p178 = scmp.eq.s32.totalorder %s33, 0
      %p179 = por %p177, %p178
      %p180 = scmp.ne.s32.totalorder %s172, %s174
      %p181 = scmp.eq.s32.totalorder %s38, 1
      %p182 = por %p180, %p181
      %p183 = scmp.ne.s32.totalorder %s174, %s175
      %p184 = scmp.eq.s32.totalorder %s38, 0
      %p185 = por %p183, %p184
      %p186 = scmp.ne.s32.totalorder %s174, %s175
      %p187 = scmp.eq.s32.totalorder %s39, 1
      %p188 = por %p186, %p187
      %p190 = scmp.ne.s32.totalorder %s175, %s189
      %p191 = scmp.eq.s32.totalorder %s39, 0
      %p192 = por %p190, %p191
      %s194 = sadd.s32 %s193, 1
      %p197 = scmp.eq.s32.totalorder %s33, 1
      %p198 = scmp.ne.s32.totalorder %s193, %s195
      %p199 = scmp.eq.s32.totalorder %s33, 0
      %p200 = por %p198, %p199
      %p201 = scmp.ne.s32.totalorder %s193, %s195
      %p202 = scmp.eq.s32.totalorder %s38, 1
      %p203 = por %p201, %p202
      %p204 = scmp.ne.s32.totalorder %s195, %s196
      %p205 = scmp.eq.s32.totalorder %s38, 0
      %p206 = por %p204, %p205
      %p207 = scmp.ne.s32.totalorder %s195, %s196
      %p208 = scmp.eq.s32.totalorder %s39, 1
      %p209 = por %p207, %p208
      %p211 = scmp.ne.s32.totalorder %s196, %s210
      %p212 = scmp.eq.s32.totalorder %s39, 0
      %p213 = por %p211, %p212
      %s215 = sadd.s32 %s214, 1
      %p218 = scmp.eq.s32.totalorder %s33, 1
      %p219 = scmp.ne.s32.totalorder %s214, %s216
      %p220 = scmp.eq.s32.totalorder %s33, 0
      %p221 = por %p219, %p220
      %p222 = scmp.ne.s32.totalorder %s214, %s216
      %p223 = scmp.eq.s32.totalorder %s38, 1
      %p224 = por %p222, %p223
      %p225 = scmp.ne.s32.totalorder %s216, %s217
      %p226 = scmp.eq.s32.totalorder %s38, 0
      %p227 = por %p225, %p226
      %p228 = scmp.ne.s32.totalorder %s216, %s217
      %p229 = scmp.eq.s32.totalorder %s39, 1
      %p230 = por %p228, %p229
      %p232 = scmp.ne.s32.totalorder %s217, %s231
      %p233 = scmp.eq.s32.totalorder %s39, 0
      %p234 = por %p232, %p233
      %s236 = sadd.s32 %s235, 1
      %p239 = scmp.eq.s32.totalorder %s33, 1
      %p240 = scmp.ne.s32.totalorder %s235, %s237
      %p241 = scmp.eq.s32.totalorder %s33, 0
      %p242 = por %p240, %p241
      %p243 = scmp.ne.s32.totalorder %s235, %s237
      %p244 = scmp.eq.s32.totalorder %s38, 1
      %p245 = por %p243, %p244
      %p246 = scmp.ne.s32.totalorder %s237, %s238
      %p247 = scmp.eq.s32.totalorder %s38, 0
      %p248 = por %p246, %p247
      %p249 = scmp.ne.s32.totalorder %s237, %s238
      %p250 = scmp.eq.s32.totalorder %s39, 1
      %p251 = por %p249, %p250
      %p253 = scmp.ne.s32.totalorder %s238, %s252
      %p254 = scmp.eq.s32.totalorder %s39, 0
      %p255 = por %p253, %p254
      %s257 = sadd.s32 %s256, 1
      %p260 = scmp.eq.s32.totalorder %s33, 1
      %p261 = scmp.ne.s32.totalorder %s256, %s258
      %p262 = scmp.eq.s32.totalorder %s33, 0
      %p263 = por %p261, %p262
      %p264 = scmp.ne.s32.totalorder %s256, %s258
      %p265 = scmp.eq.s32.totalorder %s38, 1
      %p266 = por %p264, %p265
      %p267 = scmp.ne.s32.totalorder %s258, %s259
      %p268 = scmp.eq.s32.totalorder %s38, 0
      %p269 = por %p267, %p268
      %p270 = scmp.ne.s32.totalorder %s258, %s259
      %p271 = scmp.eq.s32.totalorder %s39, 1
      %p272 = por %p270, %p271
      %p274 = scmp.ne.s32.totalorder %s259, %s273
      %p275 = scmp.eq.s32.totalorder %s39, 0
      %p276 = por %p274, %p275
      %s278 = sadd.s32 %s277, 1
      %p281 = scmp.eq.s32.totalorder %s33, 1
      %p282 = scmp.ne.s32.totalorder %s277, %s279
      %p283 = scmp.eq.s32.totalorder %s33, 0
      %p284 = por %p282, %p283
      %p285 = scmp.ne.s32.totalorder %s277, %s279
      %p286 = scmp.eq.s32.totalorder %s38, 1
      %p287 = por %p285, %p286
      %p288 = scmp.ne.s32.totalorder %s279, %s280
      %p289 = scmp.eq.s32.totalorder %s38, 0
      %p290 = por %p288, %p289
      %p291 = scmp.ne.s32.totalorder %s279, %s280
      %p292 = scmp.eq.s32.totalorder %s39, 1
      %p293 = por %p291, %p292
      %p295 = scmp.ne.s32.totalorder %s280, %s294
      %p296 = scmp.eq.s32.totalorder %s39, 0
      %p297 = por %p295, %p296
      %s299 = sadd.s32 %s298, 1
      %p302 = scmp.eq.s32.totalorder %s33, 1
      %p303 = scmp.ne.s32.totalorder %s298, %s300
      %p304 = scmp.eq.s32.totalorder %s33, 0
      %p305 = por %p303, %p304
      %p306 = scmp.ne.s32.totalorder %s298, %s300
      %p307 = scmp.eq.s32.totalorder %s38, 1
      %p308 = por %p306, %p307
      %p309 = scmp.ne.s32.totalorder %s300, %s301
      %p310 = scmp.eq.s32.totalorder %s38, 0
      %p311 = por %p309, %p310
      %p312 = scmp.ne.s32.totalorder %s300, %s301
      %p313 = scmp.eq.s32.totalorder %s39, 1
      %p314 = por %p312, %p313
      %p316 = scmp.ne.s32.totalorder %s301, %s315
      %p317 = scmp.eq.s32.totalorder %s39, 0
      %p318 = por %p316, %p317
      %s320 = sadd.s32 %s319, 1
      %p323 = scmp.eq.s32.totalorder %s33, 1
      %p324 = scmp.ne.s32.totalorder %s319, %s321
      %p325 = scmp.eq.s32.totalorder %s33, 0
      %p326 = por %p324, %p325
      %p327 = scmp.ne.s32.totalorder %s319, %s321
      %p328 = scmp.eq.s32.totalorder %s38, 1
      %p329 = por %p327, %p328
      %p330 = scmp.ne.s32.totalorder %s321, %s322
      %p331 = scmp.eq.s32.totalorder %s38, 0
      %p332 = por %p330, %p331
      %p333 = scmp.ne.s32.totalorder %s321, %s322
      %p334 = scmp.eq.s32.totalorder %s39, 1
      %p335 = por %p333, %p334
      %p337 = scmp.ne.s32.totalorder %s322, %s336
      %p338 = scmp.eq.s32.totalorder %s39, 0
      %p339 = por %p337, %p338
      %s341 = sadd.s32 %s340, 1
      %p344 = scmp.eq.s32.totalorder %s33, 1
      %p345 = scmp.ne.s32.totalorder %s340, %s342
      %p346 = scmp.eq.s32.totalorder %s33, 0
      %p347 = por %p345, %p346
      %p348 = scmp.ne.s32.totalorder %s340, %s342
      %p349 = scmp.eq.s32.totalorder %s38, 1
      %p350 = por %p348, %p349
      %p351 = scmp.ne.s32.totalorder %s342, %s343
      %p352 = scmp.eq.s32.totalorder %s38, 0
      %p353 = por %p351, %p352
      %p354 = scmp.ne.s32.totalorder %s342, %s343
      %p355 = scmp.eq.s32.totalorder %s39, 1
      %p356 = por %p354, %p355
      %p358 = scmp.ne.s32.totalorder %s343, %s357
      %p359 = scmp.eq.s32.totalorder %s39, 0
      %p360 = por %p358, %p359
      %s362 = sadd.s32 %s361, 1
      %p365 = scmp.eq.s32.totalorder %s33, 1
      %p366 = scmp.ne.s32.totalorder %s361, %s363
      %p367 = scmp.eq.s32.totalorder %s33, 0
      %p368 = por %p366, %p367
      %p369 = scmp.ne.s32.totalorder %s361, %s363
      %p370 = scmp.eq.s32.totalorder %s38, 1
      %p371 = por %p369, %p370
      %p372 = scmp.ne.s32.totalorder %s363, %s364
      %p373 = scmp.eq.s32.totalorder %s38, 0
      %p374 = por %p372, %p373
      %p375 = scmp.ne.s32.totalorder %s363, %s364
      %p376 = scmp.eq.s32.totalorder %s39, 1
      %p377 = por %p375, %p376
      %p379 = scmp.ne.s32.totalorder %s364, %s378
      %p380 = scmp.eq.s32.totalorder %s39, 0
      %p381 = por %p379, %p380
      %s382 = ssub.s32 %s33, %s40
      %p383 = scmp.eq.s32.totalorder %s382, 0
      %s385 = sadd.s32 %s384, 1
      %s386 = scalar_select %p383, %s384, %s385
      %p389 = pneg %p383
      %p390 = scmp.eq.s32.totalorder %s33, 1
      %p391 = por %p389, %p390
      %p392 = scmp.ne.s32.totalorder %s384, %s387
      %p393 = scmp.eq.s32.totalorder %s33, 0
      %p394 = por %p392, %p393
      %p395 = scmp.ne.s32.totalorder %s384, %s387
      %p396 = scmp.eq.s32.totalorder %s38, 1
      %p397 = por %p395, %p396
      %p398 = scmp.ne.s32.totalorder %s387, %s388
      %p399 = scmp.eq.s32.totalorder %s38, 0
      %p400 = por %p398, %p399
      %p401 = scmp.ne.s32.totalorder %s387, %s388
      %p402 = scmp.eq.s32.totalorder %s39, 1
      %p403 = por %p401, %p402
      %p405 = scmp.ne.s32.totalorder %s388, %s404
      %p406 = scmp.eq.s32.totalorder %s39, 0
      %p407 = por %p405, %p406
      %s408 = ssub.s32 %s33, %s40
      %p409 = scmp.eq.s32.totalorder %s408, 0
      %s411 = sadd.s32 %s410, 1
      %s412 = scalar_select %p409, %s410, %s411
      %p415 = pneg %p409
      %p416 = scmp.eq.s32.totalorder %s33, 1
      %p417 = por %p415, %p416
      %p418 = scmp.ne.s32.totalorder %s410, %s413
      %p419 = scmp.eq.s32.totalorder %s33, 0
      %p420 = por %p418, %p419
      %p421 = scmp.ne.s32.totalorder %s410, %s413
      %p422 = scmp.eq.s32.totalorder %s38, 1
      %p423 = por %p421, %p422
      %p424 = scmp.ne.s32.totalorder %s413, %s414
      %p425 = scmp.eq.s32.totalorder %s38, 0
      %p426 = por %p424, %p425
      %p427 = scmp.ne.s32.totalorder %s413, %s414
      %p428 = scmp.eq.s32.totalorder %s39, 1
      %p429 = por %p427, %p428
      %p431 = scmp.ne.s32.totalorder %s414, %s430
      %p432 = scmp.eq.s32.totalorder %s39, 0
      %p433 = por %p431, %p432
      %p434 = scmp.le.s32.totalorder 1, %s33
      %p435 = scmp.lt.s32.totalorder %s33, 3
      %p436 = pnand %p434, %p435
      %p437 = pneg %p436
      // Predicated region
      $region9: #{tpu_custom_call.1} parent=5 // pred_check
        _
      $region10: #{tpu_custom_call.1} parent=5 // pred_check_branch
        %439 = sbr.rel (%p436) target = $region12
      $region11: #{tpu_custom_call.1} parent=5 // pred_region
        %s440 = ssub.s32 %s33, 1
        // Predicated region
        $region13: #{tpu_custom_call.1} parent=11 // pred_check
          %p441 = pneg %p80
        $region14: #{tpu_custom_call.1} parent=11 // pred_check_branch
          %443 = sbr.rel (%p441) target = $region16
        $region15: #{tpu_custom_call.1} parent=11 // pred_region
          %445 = vsyncadd [#allocation6], 0
          %s447 = sshll.u32 %s1, 4
          %s448 = int_to_ptr.hbm [resolvable:$true] %s447
          %s449 = sshll.u32 [#allocation5], 4
          %s450 = int_to_ptr.vmem [resolvable:$true] %s449
          %452 = dma.hbm_to_vmem [thread:$0]  %s448, 32, %s450, [#allocation6]
        $region16: #{tpu_custom_call.1} parent=11 // pred_fallthru
          _
        // Predicated region
        $region17: #{tpu_custom_call.1} parent=11 // pred_check
          %p453 = pneg %p101
        $region18: #{tpu_custom_call.1} parent=11 // pred_check_branch
          %455 = sbr.rel (%p453) target = $region20
        $region19: #{tpu_custom_call.1} parent=11 // pred_region
          _
        $region20: #{tpu_custom_call.1} parent=11 // pred_fallthru
          _
        // Predicated region
        $region21: #{tpu_custom_call.1} parent=11 // pred_check
          %p456 = pneg %p122
        $region22: #{tpu_custom_call.1} parent=11 // pred_check_branch
          %458 = sbr.rel (%p456) target = $region24
        $region23: #{tpu_custom_call.1} parent=11 // pred_region
          %460 = vsyncadd [#allocation6], 0
          %s461 = sshll.u32 %s3, 4
          %s462 = int_to_ptr.hbm [resolvable:$true] %s461
          %s463 = sshll.u32 [#allocation7], 4
          %s464 = int_to_ptr.vmem [resolvable:$true] %s463
          %469 = dma.hbm_to_vmem [thread:$0]  %s462, 32, %s464, [#allocation6], 16, 16, 1
        $region24: #{tpu_custom_call.1} parent=11 // pred_fallthru
          _
        // Predicated region
        $region25: #{tpu_custom_call.1} parent=11 // pred_check
          %p470 = pneg %p143
        $region26: #{tpu_custom_call.1} parent=11 // pred_check_branch
          %472 = sbr.rel (%p470) target = $region28
        $region27: #{tpu_custom_call.1} parent=11 // pred_region
          _
        $region28: #{tpu_custom_call.1} parent=11 // pred_fallthru
          _
        // Predicated region
        $region29: #{tpu_custom_call.1} parent=11 // pred_check
          %p473 = pneg %p164
        $region30: #{tpu_custom_call.1} parent=11 // pred_check_branch
          %475 = sbr.rel (%p473) target = $region32
        $region31: #{tpu_custom_call.1} parent=11 // pred_region
          %477 = vsyncadd [#allocation9], 0
          %s478 = sshll.u32 %s5, 4
          %s479 = int_to_ptr.hbm [resolvable:$true] %s478
          %s480 = sshll.u32 [#allocation8], 4
          %s481 = int_to_ptr.vmem [resolvable:$true] %s480
          %486 = dma.hbm_to_vmem [thread:$0]  %s479, 32, %s481, [#allocation9], 16, 16, 1
        $region32: #{tpu_custom_call.1} parent=11 // pred_fallthru
          _
        // Predicated region
        $region33: #{tpu_custom_call.1} parent=11 // pred_check
          %p487 = pneg %p185
        $region34: #{tpu_custom_call.1} parent=11 // pred_check_branch
          %489 = sbr.rel (%p487) target = $region36
        $region35: #{tpu_custom_call.1} parent=11 // pred_region
          _
        $region36: #{tpu_custom_call.1} parent=11 // pred_fallthru
          _
        // Predicated region
        $region37: #{tpu_custom_call.1} parent=11 // pred_check
          %p490 = pneg %p206
        $region38: #{tpu_custom_call.1} parent=11 // pred_check_branch
          %492 = sbr.rel (%p490) target = $region40
        $region39: #{tpu_custom_call.1} parent=11 // pred_region
          _
        $region40: #{tpu_custom_call.1} parent=11 // pred_fallthru
          _
        // Predicated region
        $region41: #{tpu_custom_call.1} parent=11 // pred_check
          %p493 = pneg %p227
        $region42: #{tpu_custom_call.1} parent=11 // pred_check_branch
          %495 = sbr.rel (%p493) target = $region44
        $region43: #{tpu_custom_call.1} parent=11 // pred_region
          %497 = vsyncadd [#allocation9], 0
          %s498 = sshll.u32 %s8, 4
          %s499 = int_to_ptr.hbm [resolvable:$true] %s498
          %s500 = sshll.u32 [#allocation10], 4
          %s501 = int_to_ptr.vmem [resolvable:$true] %s500
          %506 = dma.hbm_to_vmem [thread:$0]  %s499, 32, %s501, [#allocation9], 16, 16, 1
        $region44: #{tpu_custom_call.1} parent=11 // pred_fallthru
          _
        // Predicated region
        $region45: #{tpu_custom_call.1} parent=11 // pred_check
          %p507 = pneg %p248
        $region46: #{tpu_custom_call.1} parent=11 // pred_check_branch
          %509 = sbr.rel (%p507) target = $region48
        $region47: #{tpu_custom_call.1} parent=11 // pred_region
          _
        $region48: #{tpu_custom_call.1} parent=11 // pred_fallthru
          _
        // Predicated region
        $region49: #{tpu_custom_call.1} parent=11 // pred_check
          %p510 = pneg %p269
        $region50: #{tpu_custom_call.1} parent=11 // pred_check_branch
          %512 = sbr.rel (%p510) target = $region52
        $region51: #{tpu_custom_call.1} parent=11 // pred_region
          %514 = vsyncadd [#allocation12], 0
          %s515 = sshll.u32 %s10, 4
          %s516 = int_to_ptr.hbm [resolvable:$true] %s515
          %s517 = sshll.u32 [#allocation11], 4
          %s518 = int_to_ptr.vmem [resolvable:$true] %s517
          %523 = dma.hbm_to_vmem [thread:$0]  %s516, 32, %s518, [#allocation12], 16, 16, 1
        $region52: #{tpu_custom_call.1} parent=11 // pred_fallthru
          _
        // Predicated region
        $region53: #{tpu_custom_call.1} parent=11 // pred_check
          %p524 = pneg %p290
        $region54: #{tpu_custom_call.1} parent=11 // pred_check_branch
          %526 = sbr.rel (%p524) target = $region56
        $region55: #{tpu_custom_call.1} parent=11 // pred_region
          _
        $region56: #{tpu_custom_call.1} parent=11 // pred_fallthru
          _
        // Predicated region
        $region57: #{tpu_custom_call.1} parent=11 // pred_check
          %p527 = pneg %p311
        $region58: #{tpu_custom_call.1} parent=11 // pred_check_branch
          %529 = sbr.rel (%p527) target = $region60
        $region59: #{tpu_custom_call.1} parent=11 // pred_region
          %531 = vsyncadd [#allocation12], 0
          %s532 = sshll.u32 %s12, 4
          %s533 = int_to_ptr.hbm [resolvable:$true] %s532
          %s534 = sshll.u32 [#allocation13], 4
          %s535 = int_to_ptr.vmem [resolvable:$true] %s534
          %540 = dma.hbm_to_vmem [thread:$0]  %s533, 512, %s535, [#allocation12], 128, 128, 8
        $region60: #{tpu_custom_call.1} parent=11 // pred_fallthru
          _
        // Predicated region
        $region61: #{tpu_custom_call.1} parent=11 // pred_check
          %p541 = pneg %p332
        $region62: #{tpu_custom_call.1} parent=11 // pred_check_branch
          %543 = sbr.rel (%p541) target = $region64
        $region63: #{tpu_custom_call.1} parent=11 // pred_region
          _
        $region64: #{tpu_custom_call.1} parent=11 // pred_fallthru
          _
        // Predicated region
        $region65: #{tpu_custom_call.1} parent=11 // pred_check
          %p544 = pneg %p353
        $region66: #{tpu_custom_call.1} parent=11 // pred_check_branch
          %546 = sbr.rel (%p544) target = $region68
        $region67: #{tpu_custom_call.1} parent=11 // pred_region
          %548 = vsyncadd [#allocation15], 0
          %s549 = sshll.u32 %s14, 4
          %s550 = int_to_ptr.hbm [resolvable:$true] %s549
          %s551 = sshll.u32 [#allocation14], 4
          %s552 = int_to_ptr.vmem [resolvable:$true] %s551
          %557 = dma.hbm_to_vmem [thread:$0]  %s550, 512, %s552, [#allocation15], 128, 128, 8
        $region68: #{tpu_custom_call.1} parent=11 // pred_fallthru
          _
        // Predicated region
        $region69: #{tpu_custom_call.1} parent=11 // pred_check
          %p558 = pneg %p374
        $region70: #{tpu_custom_call.1} parent=11 // pred_check_branch
          %560 = sbr.rel (%p558) target = $region72
        $region71: #{tpu_custom_call.1} parent=11 // pred_region
          _
        $region72: #{tpu_custom_call.1} parent=11 // pred_fallthru
          _
      $region12: #{tpu_custom_call.1} parent=5 // pred_fallthru
        _
      %p561 = scmp.lt.s32.totalorder %s33, 2
      // Predicated region
      $region73: #{tpu_custom_call.1} parent=5 // pred_check
        %p562 = pneg %p561
      $region74: #{tpu_custom_call.1} parent=5 // pred_check_branch
        %564 = sbr.rel (%p562) target = $region76
      $region75: #{tpu_custom_call.1} parent=5 // pred_region
        // Predicated region
        $region77: #{tpu_custom_call.1} parent=75 // pred_check
          %p565 = pneg %p53
        $region78: #{tpu_custom_call.1} parent=75 // pred_check_branch
          %567 = sbr.rel (%p565) target = $region80
        $region79: #{tpu_custom_call.1} parent=75 // pred_region
          %s568 = sand.u32 %s43, 1
          %s569 = scalar_lea.sflag [#allocation3], %s568
          %s570 = sand.u32 %s43, 1
          %s571 = smul.addr %s570, 8
          %s572 = scalar_lea.vmem [#allocation2], %s571
          %574 = vsyncadd %s569, 0
          %s575 = smul.addr %s33, 8
          %s576 = scalar_lea.hbm %s0, %s575
          %s578 = sshll.u32 %s576, 4
          %s579 = int_to_ptr.hbm [resolvable:$true] %s578
          %s580 = sshll.u32 %s572, 4
          %s581 = int_to_ptr.vmem [resolvable:$true] %s580
          %583 = dma.hbm_to_vmem [thread:$0]  %s579, 128, %s581, %s569
        $region80: #{tpu_custom_call.1} parent=75 // pred_fallthru
          _
        // Predicated region
        $region81: #{tpu_custom_call.1} parent=75 // pred_check
          %p584 = pneg %p394
        $region82: #{tpu_custom_call.1} parent=75 // pred_check_branch
          %586 = sbr.rel (%p584) target = $region84
        $region83: #{tpu_custom_call.1} parent=75 // pred_region
          %p587 = scmp.lt.s32.totalorder %s33, 1
          %s588 = scalar_select %p587, %s33, 1
          %s589 = scalar_lea.vmem %s16, %s588
        $region84: #{tpu_custom_call.1} parent=75 // pred_fallthru
          _
      $region76: #{tpu_custom_call.1} parent=5 // pred_fallthru
        _
      %p590 = scmp.le.s32.totalorder 1, %s33
      %p591 = scmp.lt.s32.totalorder %s33, 3
      %p592 = pnand %p590, %p591
      %p593 = pneg %p592
      // Predicated region
      $region85: #{tpu_custom_call.1} parent=5 // pred_check
        _
      $region86: #{tpu_custom_call.1} parent=5 // pred_check_branch
        %595 = sbr.rel (%p592) target = $region88
      $region87: #{tpu_custom_call.1} parent=5 // pred_region
        %s596 = ssub.s32 %s33, 1
        %s597 = sand.u32 %s46, 1
        %s598 = scalar_lea.sflag [#allocation3], %s597
        %s599 = sand.u32 %s46, 1
        %s600 = smul.addr %s599, 8
        %s601 = scalar_lea.vmem [#allocation2], %s600
        // Predicated region
        $region89: #{tpu_custom_call.1} parent=87 // pred_check
          %p602 = pneg %p59
        $region90: #{tpu_custom_call.1} parent=87 // pred_check_branch
          %604 = sbr.rel (%p602) target = $region92
        $region91: #{tpu_custom_call.1} parent=87 // pred_region
          %606 = dma.done %s598, 128
        $region92: #{tpu_custom_call.1} parent=87 // pred_fallthru
          _
        // Predicated region
        $region93: #{tpu_custom_call.1} parent=87 // pred_check
          %p607 = pneg %p80
        $region94: #{tpu_custom_call.1} parent=87 // pred_check_branch
          %609 = sbr.rel (%p607) target = $region96
        $region95: #{tpu_custom_call.1} parent=87 // pred_region
          %611 = dma.done [#allocation6], 32
        $region96: #{tpu_custom_call.1} parent=87 // pred_fallthru
          _
        // Predicated region
        $region97: #{tpu_custom_call.1} parent=87 // pred_check
          %p612 = pneg %p122
        $region98: #{tpu_custom_call.1} parent=87 // pred_check_branch
          %614 = sbr.rel (%p612) target = $region100
        $region99: #{tpu_custom_call.1} parent=87 // pred_region
          %616 = dma.done [#allocation6], 32
        $region100: #{tpu_custom_call.1} parent=87 // pred_fallthru
          _
        // Predicated region
        $region101: #{tpu_custom_call.1} parent=87 // pred_check
          %p617 = pneg %p164
        $region102: #{tpu_custom_call.1} parent=87 // pred_check_branch
          %619 = sbr.rel (%p617) target = $region104
        $region103: #{tpu_custom_call.1} parent=87 // pred_region
          %621 = dma.done [#allocation9], 32
        $region104: #{tpu_custom_call.1} parent=87 // pred_fallthru
          _
        // Predicated region
        $region105: #{tpu_custom_call.1} parent=87 // pred_check
          %p622 = pneg %p227
        $region106: #{tpu_custom_call.1} parent=87 // pred_check_branch
          %624 = sbr.rel (%p622) target = $region108
        $region107: #{tpu_custom_call.1} parent=87 // pred_region
          %626 = dma.done [#allocation9], 32
        $region108: #{tpu_custom_call.1} parent=87 // pred_fallthru
          _
        // Predicated region
        $region109: #{tpu_custom_call.1} parent=87 // pred_check
          %p627 = pneg %p269
        $region110: #{tpu_custom_call.1} parent=87 // pred_check_branch
          %629 = sbr.rel (%p627) target = $region112
        $region111: #{tpu_custom_call.1} parent=87 // pred_region
          %631 = dma.done [#allocation12], 32
        $region112: #{tpu_custom_call.1} parent=87 // pred_fallthru
          _
        // Predicated region
        $region113: #{tpu_custom_call.1} parent=87 // pred_check
          %p632 = pneg %p311
        $region114: #{tpu_custom_call.1} parent=87 // pred_check_branch
          %634 = sbr.rel (%p632) target = $region116
        $region115: #{tpu_custom_call.1} parent=87 // pred_region
          %636 = dma.done [#allocation12], 512
        $region116: #{tpu_custom_call.1} parent=87 // pred_fallthru
          _
        // Predicated region
        $region117: #{tpu_custom_call.1} parent=87 // pred_check
          %p637 = pneg %p353
        $region118: #{tpu_custom_call.1} parent=87 // pred_check_branch
          %639 = sbr.rel (%p637) target = $region120
        $region119: #{tpu_custom_call.1} parent=87 // pred_region
          %641 = dma.done [#allocation15], 512
        $region120: #{tpu_custom_call.1} parent=87 // pred_fallthru
          _
        %s642 = sand.u32 %s46, 1
        %s643 = scalar_lea.sflag [#allocation3], %s642
        %s644 = sand.u32 %s46, 1
        %s645 = smul.addr %s644, 8
        %s646 = scalar_lea.vmem [#allocation2], %s645
        %p647 = pneg %p59
        %p648 = pneg %p56
        %p649 = pneg %p80
        %p650 = pneg %p77
        %p651 = pneg %p101
        %p652 = pneg %p98
        %p653 = pneg %p122
        %p654 = pneg %p119
        %p655 = pneg %p143
        %p656 = pneg %p140
        %p657 = pneg %p164
        %p658 = pneg %p161
        %p659 = pneg %p185
        %p660 = pneg %p182
        %p661 = pneg %p206
        %p662 = pneg %p203
        %p663 = pneg %p227
        %p664 = pneg %p224
        %p665 = pneg %p248
        %p666 = pneg %p245
        %p667 = pneg %p269
        %p668 = pneg %p266
        %p669 = pneg %p290
        %p670 = pneg %p287
        %p671 = pneg %p311
        %p672 = pneg %p308
        %p673 = pneg %p332
        %p674 = pneg %p329
        %p675 = pneg %p353
        %p676 = pneg %p350
        %p677 = pneg %p374
        %p678 = pneg %p371
        %p679 = scmp.lt.s32.totalorder %s38, 1
        %s680 = scalar_select %p679, %s38, 1
        %s681 = scalar_lea.vmem %s16, %s680
        %p682 = pneg %p400
        %p683 = pneg %p397
        %p684 = pneg %p426
        %p685 = pneg %p423
        %s686 = sand.u32 %s413, 1
        %s687 = scalar_lea.sflag [#allocation4], %s686
        %s688 = sand.u32 %s413, 1
        %s689 = scalar_lea.vmem [#allocation16], %s688
        %p690 = scmp.lt.s32.totalorder %s38, 1
        %s691 = scalar_select %p690, %s38, 1
        %s692 = scalar_lea.vmem %s16, %s691
        %v693 = vld [vmem:[%s601] sm:$0xff]
        %v694 = vld [vmem:[#allocation5] sm:$0x3]
        %vm695 = vcmask 261120
        %v696 = vsel %vm695, %v693, 0.0
        %697 = vadd.xlane.f32.xlu0 %v696
        %v698 = vpop.xlane.xlu0 %697
        %v699 = vrcp.pop 32.0
        %v700 = vmul.f32 32.0, %v699
        %v701 = vsub.f32 1.0, %v700
        %v702 = vmul.f32 %v699, %v701
        %v703 = vadd.f32 %v699, %v702
        %vm704 = vweird.f32 %v699
        %v705 = vsel %vm704, %v699, %v703
        %v706 = vmul.f32 %v698, %v705
        %v707 = vsub.f32 %v693, %v706
        %v708 = vmul.f32 %v707, %v707
        %v709 = vsel %vm695, %v708, 0.0
        %710 = vadd.xlane.f32.xlu0 %v709
        %v711 = vpop.xlane.xlu0 %710
        %v712 = vmul.f32 %v711, %v705
        %v713 = vadd.f32 %v712, 1e-12
        %v714 = vrsqrt.pop %v713
        %v715 = vmul.f32 %v714, %v713
        %v716 = vmul.f32 %v715, %v714
        %v717 = vmul.f32 0.5, %v716
        %v718 = vsub.f32 1.5, %v717
        %v719 = vmul.f32 %v714, %v718
        %vm720 = vweird.f32 %v713
        %vm721 = vweird.f32 %v714
        %vm722 = vmor %vm720, %vm721
        %v723 = vsel %vm722, %v714, %v719
        %v724 = vmul.f32 %v707, %v723
        %v725 = vperm.slane %v694, 0
        %v726 = vmul.f32 %v724, %v725
        %v727 = vperm.slane %v694, 1
        %v728 = vadd.f32 %v726, %v727
        %v729 = vld [vmem:[%s2] sm:$0xff]
        %v730 = vld [vmem:[%s2 + $0x8] sm:$0xff]
        %v731 = vld [vmem:[%s2 + $0x10] sm:$0xff]
        %v732 = vld [vmem:[%s2 + $0x18] sm:$0xff]
        %v733 = vld [vmem:[#allocation7] sm:$0x1]
        %v735 = vperm.slane %v733, 0
        %v738 = vsel %vm695, %v728, 0
        %740 = vmatpush.msra.mxu0 0.0
        %741 = vmatpush.msra.mxu0 0.0
        %742 = vmatpush.msra.mxu0 0.0
        %743 = vmatpush.msra.mxu0 0.0
        %744 = vmatpush.msra.mxu0 0.0
        %745 = vmatpush.msra.mxu0 0.0
        %746 = vmatpush.msra.mxu0 0.0
        %747 = vmatpush.msra.mxu0 0.0
        %748 = vmatpush.msra.mxu0 0.0
        %749 = vmatpush.msra.mxu0 0.0
        %750 = vmatpush.msra.mxu0 0.0
        %751 = vmatpush.msra.mxu0 0.0
        %752 = vmatpush.msra.mxu0 %v732
        %753 = vmatpush.msra.mxu0 %v731
        %754 = vmatpush.msra.mxu0 %v730
        %755 = vmatpush.msra.mxu0 %v729
        %756 = vmatmul.f32.gmra.mxu0 %v738
        %v757 = vpop.f32.mrf.mxu0
        %v758 = vadd.f32 %v735, %v757
        %759 = vdwg.mxu0
        %761 = vrot.lane.b32.xlu0 %v758, 96
        %v762 = vpop.permute.xlu0 %761
        %vm763 = vcmask 64512
        %v764 = vsel %vm763, %v758, 0
        %v766 = vsel %vm763, %v762, 0
        %768 = vmatpush.xpose.msra.mxu0 0.0
        %769 = vmatpush.xpose.msra.mxu0 0.0
        %770 = vmatpush.xpose.msra.mxu0 0.0
        %771 = vmatpush.xpose.msra.mxu0 0.0
        %772 = vmatpush.xpose.msra.mxu0 0.0
        %773 = vmatpush.xpose.msra.mxu0 0.0
        %774 = vmatpush.xpose.msra.mxu0 0.0
        %775 = vmatpush.xpose.msra.mxu0 0.0
        %776 = vmatpush.xpose.msra.mxu0 0.0
        %777 = vmatpush.xpose.msra.mxu0 0.0
        %778 = vmatpush.xpose.msra.mxu0 0.0
        %779 = vmatpush.xpose.msra.mxu0 0.0
        %780 = vmatpush.xpose.msra.mxu0 0.0
        %781 = vmatpush.xpose.msra.mxu0 0.0
        %782 = vmatpush.xpose.msra.mxu0 0.0
        %783 = vmatpush.xpose.msra.mxu0 %v766
        %784 = vmatmul.f32.gmra.mxu0 %v764
        %v785 = vpop.f32.mrf.mxu0
        %v786 = vadd.f32 0.0, %v785
        %787 = vdwg.mxu0
        %v788 = vmul.f32 %v786, 0.35355338
        %v789 = vsel %vm763, %v788, -inf
        %790 = vmax.xlane.f32.xlu0 %v789
        %v791 = vpop.xlane.xlu0 %790
        %v792 = vsub.f32 %v788, %v791
        %v793 = vmul.f32 %v792, 1.442695
        %v794 = vpow.pop %v793
        %v795 = vsel %vm763, %v794, 0.0
        %796 = vadd.xlane.f32.xlu0 %v795
        %v797 = vpop.xlane.xlu0 %796
        %v798 = vrcp.pop %v797
        %v799 = vmul.f32 %v797, %v798
        %v800 = vsub.f32 1.0, %v799
        %v801 = vmul.f32 %v798, %v800
        %v802 = vadd.f32 %v798, %v801
        %vm803 = vweird.f32 %v797
        %vm804 = vweird.f32 %v798
        %vm805 = vmor %vm803, %vm804
        %v806 = vsel %vm805, %v798, %v802
        %v807 = vand.u32 2147483647, %v797
        %vm808 = vcmp.eq.f32.partialorder %v807, 8.507059e+37
        %v809 = vand.u32 %v797, 2147483648
        %v810 = vor.u32 1.1754944e-38, %v809
        %v811 = vsel %vm808, %v810, %v806
        %v812 = vmul.f32 %v794, %v811
        %813 = vrot.lane.b32.xlu0 %v758, 64
        %v814 = vpop.permute.xlu0 %813
        %v817 = vsel %vm763, %v812, 0
        %819 = vmatpush.msra.mxu0 0.0
        %820 = vmatpush.msra.mxu0 0.0
        %821 = vmatpush.msra.mxu0 0.0
        %822 = vmatpush.msra.mxu0 0.0
        %823 = vmatpush.msra.mxu0 0.0
        %824 = vmatpush.msra.mxu0 0.0
        %825 = vmatpush.msra.mxu0 0.0
        %826 = vmatpush.msra.mxu0 0.0
        %827 = vmatpush.msra.mxu0 0.0
        %828 = vmatpush.msra.mxu0 0.0
        %829 = vmatpush.msra.mxu0 0.0
        %830 = vmatpush.msra.mxu0 0.0
        %831 = vmatpush.msra.mxu0 0.0
        %832 = vmatpush.msra.mxu0 0.0
        %833 = vmatpush.msra.mxu0 0.0
        %834 = vmatpush.msra.mxu0 %v814
        %835 = vmatmul.f32.gmra.mxu0 %v817
        %v836 = vpop.f32.mrf.mxu0
        %v837 = vadd.f32 0.0, %v836
        %838 = vdwg.mxu0
        %839 = vrot.lane.b32.xlu0 %v758, 120
        %v840 = vpop.permute.xlu0 %839
        %841 = vrot.lane.b32.xlu0 %v758, 88
        %v842 = vpop.permute.xlu0 %841
        %v843 = vsel %vm763, %v840, 0
        %v845 = vsel %vm763, %v842, 0
        %847 = vmatpush.xpose.msra.mxu0 0.0
        %848 = vmatpush.xpose.msra.mxu0 0.0
        %849 = vmatpush.xpose.msra.mxu0 0.0
        %850 = vmatpush.xpose.msra.mxu0 0.0
        %851 = vmatpush.xpose.msra.mxu0 0.0
        %852 = vmatpush.xpose.msra.mxu0 0.0
        %853 = vmatpush.xpose.msra.mxu0 0.0
        %854 = vmatpush.xpose.msra.mxu0 0.0
        %855 = vmatpush.xpose.msra.mxu0 0.0
        %856 = vmatpush.xpose.msra.mxu0 0.0
        %857 = vmatpush.xpose.msra.mxu0 0.0
        %858 = vmatpush.xpose.msra.mxu0 0.0
        %859 = vmatpush.xpose.msra.mxu0 0.0
        %860 = vmatpush.xpose.msra.mxu0 0.0
        %861 = vmatpush.xpose.msra.mxu0 0.0
        %862 = vmatpush.xpose.msra.mxu0 %v845
        %863 = vmatmul.f32.gmra.mxu0 %v843
        %v864 = vpop.f32.mrf.mxu0
        %v865 = vadd.f32 0.0, %v864
        %866 = vdwg.mxu0
        %v867 = vmul.f32 %v865, 0.35355338
        %v868 = vsel %vm763, %v867, -inf
        %869 = vmax.xlane.f32.xlu0 %v868
        %v870 = vpop.xlane.xlu0 %869
        %v871 = vsub.f32 %v867, %v870
        %v872 = vmul.f32 %v871, 1.442695
        %v873 = vpow.pop %v872
        %v874 = vsel %vm763, %v873, 0.0
        %875 = vadd.xlane.f32.xlu0 %v874
        %v876 = vpop.xlane.xlu0 %875
        %v877 = vrcp.pop %v876
        %v878 = vmul.f32 %v876, %v877
        %v879 = vsub.f32 1.0, %v878
        %v880 = vmul.f32 %v877, %v879
        %v881 = vadd.f32 %v877, %v880
        %vm882 = vweird.f32 %v876
        %vm883 = vweird.f32 %v877
        %vm884 = vmor %vm882, %vm883
        %v885 = vsel %vm884, %v877, %v881
        %v886 = vand.u32 2147483647, %v876
        %vm887 = vcmp.eq.f32.partialorder %v886, 8.507059e+37
        %v888 = vand.u32 %v876, 2147483648
        %v889 = vor.u32 1.1754944e-38, %v888
        %v890 = vsel %vm887, %v889, %v885
        %v891 = vmul.f32 %v873, %v890
        %892 = vrot.lane.b32.xlu0 %v758, 56
        %v893 = vpop.permute.xlu0 %892
        %v896 = vsel %vm763, %v891, 0
        %898 = vmatpush.msra.mxu0 0.0
        %899 = vmatpush.msra.mxu0 0.0
        %900 = vmatpush.msra.mxu0 0.0
        %901 = vmatpush.msra.mxu0 0.0
        %902 = vmatpush.msra.mxu0 0.0
        %903 = vmatpush.msra.mxu0 0.0
        %904 = vmatpush.msra.mxu0 0.0
        %905 = vmatpush.msra.mxu0 0.0
        %906 = vmatpush.msra.mxu0 0.0
        %907 = vmatpush.msra.mxu0 0.0
        %908 = vmatpush.msra.mxu0 0.0
        %909 = vmatpush.msra.mxu0 0.0
        %910 = vmatpush.msra.mxu0 0.0
        %911 = vmatpush.msra.mxu0 0.0
        %912 = vmatpush.msra.mxu0 0.0
        %913 = vmatpush.msra.mxu0 %v893
        %914 = vmatmul.f32.gmra.mxu0 %v896
        %v915 = vpop.f32.mrf.mxu0
        %v916 = vadd.f32 0.0, %v915
        %917 = vdwg.mxu0
        %918 = vrot.lane.b32.xlu0 %v758, 112
        %v919 = vpop.permute.xlu0 %918
        %920 = vrot.lane.b32.xlu0 %v758, 80
        %v921 = vpop.permute.xlu0 %920
        %v922 = vsel %vm763, %v919, 0
        %v924 = vsel %vm763, %v921, 0
        %926 = vmatpush.xpose.msra.mxu0 0.0
        %927 = vmatpush.xpose.msra.mxu0 0.0
        %928 = vmatpush.xpose.msra.mxu0 0.0
        %929 = vmatpush.xpose.msra.mxu0 0.0
        %930 = vmatpush.xpose.msra.mxu0 0.0
        %931 = vmatpush.xpose.msra.mxu0 0.0
        %932 = vmatpush.xpose.msra.mxu0 0.0
        %933 = vmatpush.xpose.msra.mxu0 0.0
        %934 = vmatpush.xpose.msra.mxu0 0.0
        %935 = vmatpush.xpose.msra.mxu0 0.0
        %936 = vmatpush.xpose.msra.mxu0 0.0
        %937 = vmatpush.xpose.msra.mxu0 0.0
        %938 = vmatpush.xpose.msra.mxu0 0.0
        %939 = vmatpush.xpose.msra.mxu0 0.0
        %940 = vmatpush.xpose.msra.mxu0 0.0
        %941 = vmatpush.xpose.msra.mxu0 %v924
        %942 = vmatmul.f32.gmra.mxu0 %v922
        %v943 = vpop.f32.mrf.mxu0
        %v944 = vadd.f32 0.0, %v943
        %945 = vdwg.mxu0
        %v946 = vmul.f32 %v944, 0.35355338
        %v947 = vsel %vm763, %v946, -inf
        %948 = vmax.xlane.f32.xlu0 %v947
        %v949 = vpop.xlane.xlu0 %948
        %v950 = vsub.f32 %v946, %v949
        %v951 = vmul.f32 %v950, 1.442695
        %v952 = vpow.pop %v951
        %v953 = vsel %vm763, %v952, 0.0
        %954 = vadd.xlane.f32.xlu0 %v953
        %v955 = vpop.xlane.xlu0 %954
        %v956 = vrcp.pop %v955
        %v957 = vmul.f32 %v955, %v956
        %v958 = vsub.f32 1.0, %v957
        %v959 = vmul.f32 %v956, %v958
        %v960 = vadd.f32 %v956, %v959
        %vm961 = vweird.f32 %v955
        %vm962 = vweird.f32 %v956
        %vm963 = vmor %vm961, %vm962
        %v964 = vsel %vm963, %v956, %v960
        %v965 = vand.u32 2147483647, %v955
        %vm966 = vcmp.eq.f32.partialorder %v965, 8.507059e+37
        %v967 = vand.u32 %v955, 2147483648
        %v968 = vor.u32 1.1754944e-38, %v967
        %v969 = vsel %vm966, %v968, %v964
        %v970 = vmul.f32 %v952, %v969
        %971 = vrot.lane.b32.xlu0 %v758, 48
        %v972 = vpop.permute.xlu0 %971
        %v975 = vsel %vm763, %v970, 0
        %977 = vmatpush.msra.mxu0 0.0
        %978 = vmatpush.msra.mxu0 0.0
        %979 = vmatpush.msra.mxu0 0.0
        %980 = vmatpush.msra.mxu0 0.0
        %981 = vmatpush.msra.mxu0 0.0
        %982 = vmatpush.msra.mxu0 0.0
        %983 = vmatpush.msra.mxu0 0.0
        %984 = vmatpush.msra.mxu0 0.0
        %985 = vmatpush.msra.mxu0 0.0
        %986 = vmatpush.msra.mxu0 0.0
        %987 = vmatpush.msra.mxu0 0.0
        %988 = vmatpush.msra.mxu0 0.0
        %989 = vmatpush.msra.mxu0 0.0
        %990 = vmatpush.msra.mxu0 0.0
        %991 = vmatpush.msra.mxu0 0.0
        %992 = vmatpush.msra.mxu0 %v972
        %993 = vmatmul.f32.gmra.mxu0 %v975
        %v994 = vpop.f32.mrf.mxu0
        %v995 = vadd.f32 0.0, %v994
        %996 = vdwg.mxu0
        %997 = vrot.lane.b32.xlu0 %v758, 104
        %v998 = vpop.permute.xlu0 %997
        %999 = vrot.lane.b32.xlu0 %v758, 72
        %v1000 = vpop.permute.xlu0 %999
        %v1001 = vsel %vm763, %v998, 0
        %v1003 = vsel %vm763, %v1000, 0
        %1005 = vmatpush.xpose.msra.mxu0 0.0
        %1006 = vmatpush.xpose.msra.mxu0 0.0
        %1007 = vmatpush.xpose.msra.mxu0 0.0
        %1008 = vmatpush.xpose.msra.mxu0 0.0
        %1009 = vmatpush.xpose.msra.mxu0 0.0
        %1010 = vmatpush.xpose.msra.mxu0 0.0
        %1011 = vmatpush.xpose.msra.mxu0 0.0
        %1012 = vmatpush.xpose.msra.mxu0 0.0
        %1013 = vmatpush.xpose.msra.mxu0 0.0
        %1014 = vmatpush.xpose.msra.mxu0 0.0
        %1015 = vmatpush.xpose.msra.mxu0 0.0
        %1016 = vmatpush.xpose.msra.mxu0 0.0
        %1017 = vmatpush.xpose.msra.mxu0 0.0
        %1018 = vmatpush.xpose.msra.mxu0 0.0
        %1019 = vmatpush.xpose.msra.mxu0 0.0
        %1020 = vmatpush.xpose.msra.mxu0 %v1003
        %1021 = vmatmul.f32.gmra.mxu0 %v1001
        %v1022 = vpop.f32.mrf.mxu0
        %v1023 = vadd.f32 0.0, %v1022
        %1024 = vdwg.mxu0
        %v1025 = vmul.f32 %v1023, 0.35355338
        %v1026 = vsel %vm763, %v1025, -inf
        %1027 = vmax.xlane.f32.xlu0 %v1026
        %v1028 = vpop.xlane.xlu0 %1027
        %v1029 = vsub.f32 %v1025, %v1028
        %v1030 = vmul.f32 %v1029, 1.442695
        %v1031 = vpow.pop %v1030
        %v1032 = vsel %vm763, %v1031, 0.0
        %1033 = vadd.xlane.f32.xlu0 %v1032
        %v1034 = vpop.xlane.xlu0 %1033
        %v1035 = vrcp.pop %v1034
        %v1036 = vmul.f32 %v1034, %v1035
        %v1037 = vsub.f32 1.0, %v1036
        %v1038 = vmul.f32 %v1035, %v1037
        %v1039 = vadd.f32 %v1035, %v1038
        %vm1040 = vweird.f32 %v1034
        %vm1041 = vweird.f32 %v1035
        %vm1042 = vmor %vm1040, %vm1041
        %v1043 = vsel %vm1042, %v1035, %v1039
        %v1044 = vand.u32 2147483647, %v1034
        %vm1045 = vcmp.eq.f32.partialorder %v1044, 8.507059e+37
        %v1046 = vand.u32 %v1034, 2147483648
        %v1047 = vor.u32 1.1754944e-38, %v1046
        %v1048 = vsel %vm1045, %v1047, %v1043
        %v1049 = vmul.f32 %v1031, %v1048
        %1050 = vrot.lane.b32.xlu0 %v758, 40
        %v1051 = vpop.permute.xlu0 %1050
        %v1054 = vsel %vm763, %v1049, 0
        %1056 = vmatpush.msra.mxu0 0.0
        %1057 = vmatpush.msra.mxu0 0.0
        %1058 = vmatpush.msra.mxu0 0.0
        %1059 = vmatpush.msra.mxu0 0.0
        %1060 = vmatpush.msra.mxu0 0.0
        %1061 = vmatpush.msra.mxu0 0.0
        %1062 = vmatpush.msra.mxu0 0.0
        %1063 = vmatpush.msra.mxu0 0.0
        %1064 = vmatpush.msra.mxu0 0.0
        %1065 = vmatpush.msra.mxu0 0.0
        %1066 = vmatpush.msra.mxu0 0.0
        %1067 = vmatpush.msra.mxu0 0.0
        %1068 = vmatpush.msra.mxu0 0.0
        %1069 = vmatpush.msra.mxu0 0.0
        %1070 = vmatpush.msra.mxu0 0.0
        %1071 = vmatpush.msra.mxu0 %v1051
        %1072 = vmatmul.f32.gmra.mxu0 %v1054
        %v1073 = vpop.f32.mrf.mxu0
        %v1074 = vadd.f32 0.0, %v1073
        %1075 = vdwg.mxu0
        %1077 = vrot.lane.b32.xlu0 %v916, 8
        %v1078 = vpop.permute.xlu0 %1077
        %1081 = vrot.lane.b32.xlu0 %v995, 16
        %v1082 = vpop.permute.xlu0 %1081
        %1085 = vrot.lane.b32.xlu0 %v1074, 24
        %v1086 = vpop.permute.xlu0 %1085
        %v1088 = vsel %vm763, %v837, %v1078
        %vm1089 = vcmask 130048
        %v1090 = vsel %vm1089, %v1088, %v1082
        %vm1091 = vcmask 195584
        %v1092 = vsel %vm1091, %v1090, %v1086
        %v1093 = vld [vmem:[%s4] sm:$0xff]
        %v1094 = vld [vmem:[%s4 + $0x8] sm:$0xff]
        %v1095 = vld [vmem:[%s4 + $0x10] sm:$0xff]
        %v1096 = vld [vmem:[%s4 + $0x18] sm:$0xff]
        %v1097 = vld [vmem:[#allocation8] sm:$0x1]
        %v1099 = vperm.slane %v1097, 0
        %v1102 = vsel %vm695, %v1092, 0
        %1104 = vmatpush.msra.mxu0 0.0
        %1105 = vmatpush.msra.mxu0 0.0
        %1106 = vmatpush.msra.mxu0 0.0
        %1107 = vmatpush.msra.mxu0 0.0
        %1108 = vmatpush.msra.mxu0 0.0
        %1109 = vmatpush.msra.mxu0 0.0
        %1110 = vmatpush.msra.mxu0 0.0
        %1111 = vmatpush.msra.mxu0 0.0
        %1112 = vmatpush.msra.mxu0 0.0
        %1113 = vmatpush.msra.mxu0 0.0
        %1114 = vmatpush.msra.mxu0 0.0
        %1115 = vmatpush.msra.mxu0 0.0
        %1116 = vmatpush.msra.mxu0 %v1096
        %1117 = vmatpush.msra.mxu0 %v1095
        %1118 = vmatpush.msra.mxu0 %v1094
        %1119 = vmatpush.msra.mxu0 %v1093
        %1120 = vmatmul.f32.gmra.mxu0 %v1102
        %v1121 = vpop.f32.mrf.mxu0
        %v1122 = vadd.f32 %v1099, %v1121
        %1123 = vdwg.mxu0
        %v1124 = vadd.f32 %v728, %v1122
        %v1125 = vld [vmem:[%s6] sm:$0x3]
        %v1126 = vsel %vm695, %v1124, 0.0
        %1127 = vadd.xlane.f32.xlu0 %v1126
        %v1128 = vpop.xlane.xlu0 %1127
        %v1129 = vmul.f32 %v1128, %v705
        %v1130 = vsub.f32 %v1124, %v1129
        %v1131 = vmul.f32 %v1130, %v1130
        %v1132 = vsel %vm695, %v1131, 0.0
        %1133 = vadd.xlane.f32.xlu0 %v1132
        %v1134 = vpop.xlane.xlu0 %1133
        %v1135 = vmul.f32 %v1134, %v705
        %v1136 = vadd.f32 %v1135, 1e-12
        %v1137 = vrsqrt.pop %v1136
        %v1138 = vmul.f32 %v1137, %v1136
        %v1139 = vmul.f32 %v1138, %v1137
        %v1140 = vmul.f32 0.5, %v1139
        %v1141 = vsub.f32 1.5, %v1140
        %v1142 = vmul.f32 %v1137, %v1141
        %vm1143 = vweird.f32 %v1136
        %vm1144 = vweird.f32 %v1137
        %vm1145 = vmor %vm1143, %vm1144
        %v1146 = vsel %vm1145, %v1137, %v1142
        %v1147 = vmul.f32 %v1130, %v1146
        %v1148 = vperm.slane %v1125, 0
        %v1149 = vmul.f32 %v1147, %v1148
        %v1150 = vperm.slane %v1125, 1
        %v1151 = vadd.f32 %v1149, %v1150
        %v1152 = vld [vmem:[%s7] sm:$0xff]
        %v1153 = vld [vmem:[%s7 + $0x8] sm:$0xff]
        %v1154 = vld [vmem:[%s7 + $0x10] sm:$0xff]
        %v1155 = vld [vmem:[%s7 + $0x18] sm:$0xff]
        %v1156 = vld [vmem:[#allocation10] sm:$0x1]
        %v1158 = vperm.slane %v1156, 0
        %v1161 = vsel %vm695, %v1151, 0
        %1163 = vmatpush.msra.mxu0 0.0
        %1164 = vmatpush.msra.mxu0 0.0
        %1165 = vmatpush.msra.mxu0 0.0
        %1166 = vmatpush.msra.mxu0 0.0
        %1167 = vmatpush.msra.mxu0 0.0
        %1168 = vmatpush.msra.mxu0 0.0
        %1169 = vmatpush.msra.mxu0 0.0
        %1170 = vmatpush.msra.mxu0 0.0
        %1171 = vmatpush.msra.mxu0 0.0
        %1172 = vmatpush.msra.mxu0 0.0
        %1173 = vmatpush.msra.mxu0 0.0
        %1174 = vmatpush.msra.mxu0 0.0
        %1175 = vmatpush.msra.mxu0 %v1155
        %1176 = vmatpush.msra.mxu0 %v1154
        %1177 = vmatpush.msra.mxu0 %v1153
        %1178 = vmatpush.msra.mxu0 %v1152
        %1179 = vmatmul.f32.gmra.mxu0 %v1161
        %v1180 = vpop.f32.mrf.mxu0
        %v1181 = vadd.f32 %v1158, %v1180
        %1182 = vdwg.mxu0
        %v1183 = vmul.f32 %v1181, 0.5
        %v1184 = vmul.f32 %v1181, 0.044715
        %v1185 = vmul.f32 %v1184, %v1181
        %v1186 = vmul.f32 %v1185, %v1181
        %v1187 = vadd.f32 %v1181, %v1186
        %v1188 = vmul.f32 %v1187, 0.7978846
        %v1189 = vtanh.pop %v1188
        %v1190 = vadd.f32 %v1189, 1.0
        %v1191 = vmul.f32 %v1183, %v1190
        %v1192 = vld [vmem:[%s9] sm:$0xff]
        %v1193 = vld [vmem:[%s9 + $0x8] sm:$0xff]
        %v1194 = vld [vmem:[%s9 + $0x10] sm:$0xff]
        %v1195 = vld [vmem:[%s9 + $0x18] sm:$0xff]
        %v1196 = vld [vmem:[%s9 + $0x20] sm:$0xff]
        %v1197 = vld [vmem:[%s9 + $0x28] sm:$0xff]
        %v1198 = vld [vmem:[%s9 + $0x30] sm:$0xff]
        %v1199 = vld [vmem:[%s9 + $0x38] sm:$0xff]
        %v1200 = vld [vmem:[#allocation11] sm:$0x1]
        %v1202 = vperm.slane %v1200, 0
        %vm1204 = vcmask 523264
        %v1206 = vsel %vm1204, %v1191, 0
        %1208 = vmatpush.msra.mxu0 0.0
        %1209 = vmatpush.msra.mxu0 0.0
        %1210 = vmatpush.msra.mxu0 0.0
        %1211 = vmatpush.msra.mxu0 0.0
        %1212 = vmatpush.msra.mxu0 0.0
        %1213 = vmatpush.msra.mxu0 0.0
        %1214 = vmatpush.msra.mxu0 0.0
        %1215 = vmatpush.msra.mxu0 0.0
        %1216 = vmatpush.msra.mxu0 %v1199
        %1217 = vmatpush.msra.mxu0 %v1198
        %1218 = vmatpush.msra.mxu0 %v1197
        %1219 = vmatpush.msra.mxu0 %v1196
        %1220 = vmatpush.msra.mxu0 %v1195
        %1221 = vmatpush.msra.mxu0 %v1194
        %1222 = vmatpush.msra.mxu0 %v1193
        %1223 = vmatpush.msra.mxu0 %v1192
        %1224 = vmatmul.f32.gmra.mxu0 %v1206
        %v1225 = vpop.f32.mrf.mxu0
        %v1226 = vadd.f32 %v1202, %v1225
        %1227 = vdwg.mxu0
        %v1228 = vadd.f32 %v1151, %v1226
        %v1229 = vld [vmem:[%s11] sm:$0x3]
        %v1230 = vsel %vm695, %v1228, 0.0
        %1231 = vadd.xlane.f32.xlu0 %v1230
        %v1232 = vpop.xlane.xlu0 %1231
        %v1233 = vmul.f32 %v1232, %v705
        %v1234 = vsub.f32 %v1228, %v1233
        %v1235 = vmul.f32 %v1234, %v1234
        %v1236 = vsel %vm695, %v1235, 0.0
        %1237 = vadd.xlane.f32.xlu0 %v1236
        %v1238 = vpop.xlane.xlu0 %1237
        %v1239 = vmul.f32 %v1238, %v705
        %v1240 = vadd.f32 %v1239, 1e-12
        %v1241 = vrsqrt.pop %v1240
        %v1242 = vmul.f32 %v1241, %v1240
        %v1243 = vmul.f32 %v1242, %v1241
        %v1244 = vmul.f32 0.5, %v1243
        %v1245 = vsub.f32 1.5, %v1244
        %v1246 = vmul.f32 %v1241, %v1245
        %vm1247 = vweird.f32 %v1240
        %vm1248 = vweird.f32 %v1241
        %vm1249 = vmor %vm1247, %vm1248
        %v1250 = vsel %vm1249, %v1241, %v1246
        %v1251 = vmul.f32 %v1234, %v1250
        %v1252 = vperm.slane %v1229, 0
        %v1253 = vmul.f32 %v1251, %v1252
        %v1254 = vperm.slane %v1229, 1
        %v1255 = vadd.f32 %v1253, %v1254
        %s1256 = scalar_lea.vmem %s2, 32
        %v1257 = vld [vmem:[%s1256] sm:$0xff]
        %v1258 = vld [vmem:[%s1256 + $0x8] sm:$0xff]
        %v1259 = vld [vmem:[%s1256 + $0x10] sm:$0xff]
        %v1260 = vld [vmem:[%s1256 + $0x18] sm:$0xff]
        %s1261 = scalar_lea.vmem [#allocation7], 1
        %v1262 = vld [vmem:[%s1261] sm:$0x1]
        %v1264 = vperm.slane %v1262, 0
        %v1267 = vsel %vm695, %v1255, 0
        %1269 = vmatpush.msra.mxu0 0.0
        %1270 = vmatpush.msra.mxu0 0.0
        %1271 = vmatpush.msra.mxu0 0.0
        %1272 = vmatpush.msra.mxu0 0.0
        %1273 = vmatpush.msra.mxu0 0.0
        %1274 = vmatpush.msra.mxu0 0.0
        %1275 = vmatpush.msra.mxu0 0.0
        %1276 = vmatpush.msra.mxu0 0.0
        %1277 = vmatpush.msra.mxu0 0.0
        %1278 = vmatpush.msra.mxu0 0.0
        %1279 = vmatpush.msra.mxu0 0.0
        %1280 = vmatpush.msra.mxu0 0.0
        %1281 = vmatpush.msra.mxu0 %v1260
        %1282 = vmatpush.msra.mxu0 %v1259
        %1283 = vmatpush.msra.mxu0 %v1258
        %1284 = vmatpush.msra.mxu0 %v1257
        %1285 = vmatmul.f32.gmra.mxu0 %v1267
        %v1286 = vpop.f32.mrf.mxu0
        %v1287 = vadd.f32 %v1264, %v1286
        %1288 = vdwg.mxu0
        %1290 = vrot.lane.b32.xlu0 %v1287, 96
        %v1291 = vpop.permute.xlu0 %1290
        %v1292 = vsel %vm763, %v1287, 0
        %v1294 = vsel %vm763, %v1291, 0
        %1296 = vmatpush.xpose.msra.mxu0 0.0
        %1297 = vmatpush.xpose.msra.mxu0 0.0
        %1298 = vmatpush.xpose.msra.mxu0 0.0
        %1299 = vmatpush.xpose.msra.mxu0 0.0
        %1300 = vmatpush.xpose.msra.mxu0 0.0
        %1301 = vmatpush.xpose.msra.mxu0 0.0
        %1302 = vmatpush.xpose.msra.mxu0 0.0
        %1303 = vmatpush.xpose.msra.mxu0 0.0
        %1304 = vmatpush.xpose.msra.mxu0 0.0
        %1305 = vmatpush.xpose.msra.mxu0 0.0
        %1306 = vmatpush.xpose.msra.mxu0 0.0
        %1307 = vmatpush.xpose.msra.mxu0 0.0
        %1308 = vmatpush.xpose.msra.mxu0 0.0
        %1309 = vmatpush.xpose.msra.mxu0 0.0
        %1310 = vmatpush.xpose.msra.mxu0 0.0
        %1311 = vmatpush.xpose.msra.mxu0 %v1294
        %1312 = vmatmul.f32.gmra.mxu0 %v1292
        %v1313 = vpop.f32.mrf.mxu0
        %v1314 = vadd.f32 0.0, %v1313
        %1315 = vdwg.mxu0
        %v1316 = vmul.f32 %v1314, 0.35355338
        %v1317 = vsel %vm763, %v1316, -inf
        %1318 = vmax.xlane.f32.xlu0 %v1317
        %v1319 = vpop.xlane.xlu0 %1318
        %v1320 = vsub.f32 %v1316, %v1319
        %v1321 = vmul.f32 %v1320, 1.442695
        %v1322 = vpow.pop %v1321
        %v1323 = vsel %vm763, %v1322, 0.0
        %1324 = vadd.xlane.f32.xlu0 %v1323
        %v1325 = vpop.xlane.xlu0 %1324
        %v1326 = vrcp.pop %v1325
        %v1327 = vmul.f32 %v1325, %v1326
        %v1328 = vsub.f32 1.0, %v1327
        %v1329 = vmul.f32 %v1326, %v1328
        %v1330 = vadd.f32 %v1326, %v1329
        %vm1331 = vweird.f32 %v1325
        %vm1332 = vweird.f32 %v1326
        %vm1333 = vmor %vm1331, %vm1332
        %v1334 = vsel %vm1333, %v1326, %v1330
        %v1335 = vand.u32 2147483647, %v1325
        %vm1336 = vcmp.eq.f32.partialorder %v1335, 8.507059e+37
        %v1337 = vand.u32 %v1325, 2147483648
        %v1338 = vor.u32 1.1754944e-38, %v1337
        %v1339 = vsel %vm1336, %v1338, %v1334
        %v1340 = vmul.f32 %v1322, %v1339
        %1341 = vrot.lane.b32.xlu0 %v1287, 64
        %v1342 = vpop.permute.xlu0 %1341
        %v1345 = vsel %vm763, %v1340, 0
        %1347 = vmatpush.msra.mxu0 0.0
        %1348 = vmatpush.msra.mxu0 0.0
        %1349 = vmatpush.msra.mxu0 0.0
        %1350 = vmatpush.msra.mxu0 0.0
        %1351 = vmatpush.msra.mxu0 0.0
        %1352 = vmatpush.msra.mxu0 0.0
        %1353 = vmatpush.msra.mxu0 0.0
        %1354 = vmatpush.msra.mxu0 0.0
        %1355 = vmatpush.msra.mxu0 0.0
        %1356 = vmatpush.msra.mxu0 0.0
        %1357 = vmatpush.msra.mxu0 0.0
        %1358 = vmatpush.msra.mxu0 0.0
        %1359 = vmatpush.msra.mxu0 0.0
        %1360 = vmatpush.msra.mxu0 0.0
        %1361 = vmatpush.msra.mxu0 0.0
        %1362 = vmatpush.msra.mxu0 %v1342
        %1363 = vmatmul.f32.gmra.mxu0 %v1345
        %v1364 = vpop.f32.mrf.mxu0
        %v1365 = vadd.f32 0.0, %v1364
        %1366 = vdwg.mxu0
        %1367 = vrot.lane.b32.xlu0 %v1287, 120
        %v1368 = vpop.permute.xlu0 %1367
        %1369 = vrot.lane.b32.xlu0 %v1287, 88
        %v1370 = vpop.permute.xlu0 %1369
        %v1371 = vsel %vm763, %v1368, 0
        %v1373 = vsel %vm763, %v1370, 0
        %1375 = vmatpush.xpose.msra.mxu0 0.0
        %1376 = vmatpush.xpose.msra.mxu0 0.0
        %1377 = vmatpush.xpose.msra.mxu0 0.0
        %1378 = vmatpush.xpose.msra.mxu0 0.0
        %1379 = vmatpush.xpose.msra.mxu0 0.0
        %1380 = vmatpush.xpose.msra.mxu0 0.0
        %1381 = vmatpush.xpose.msra.mxu0 0.0
        %1382 = vmatpush.xpose.msra.mxu0 0.0
        %1383 = vmatpush.xpose.msra.mxu0 0.0
        %1384 = vmatpush.xpose.msra.mxu0 0.0
        %1385 = vmatpush.xpose.msra.mxu0 0.0
        %1386 = vmatpush.xpose.msra.mxu0 0.0
        %1387 = vmatpush.xpose.msra.mxu0 0.0
        %1388 = vmatpush.xpose.msra.mxu0 0.0
        %1389 = vmatpush.xpose.msra.mxu0 0.0
        %1390 = vmatpush.xpose.msra.mxu0 %v1373
        %1391 = vmatmul.f32.gmra.mxu0 %v1371
        %v1392 = vpop.f32.mrf.mxu0
        %v1393 = vadd.f32 0.0, %v1392
        %1394 = vdwg.mxu0
        %v1395 = vmul.f32 %v1393, 0.35355338
        %v1396 = vsel %vm763, %v1395, -inf
        %1397 = vmax.xlane.f32.xlu0 %v1396
        %v1398 = vpop.xlane.xlu0 %1397
        %v1399 = vsub.f32 %v1395, %v1398
        %v1400 = vmul.f32 %v1399, 1.442695
        %v1401 = vpow.pop %v1400
        %v1402 = vsel %vm763, %v1401, 0.0
        %1403 = vadd.xlane.f32.xlu0 %v1402
        %v1404 = vpop.xlane.xlu0 %1403
        %v1405 = vrcp.pop %v1404
        %v1406 = vmul.f32 %v1404, %v1405
        %v1407 = vsub.f32 1.0, %v1406
        %v1408 = vmul.f32 %v1405, %v1407
        %v1409 = vadd.f32 %v1405, %v1408
        %vm1410 = vweird.f32 %v1404
        %vm1411 = vweird.f32 %v1405
        %vm1412 = vmor %vm1410, %vm1411
        %v1413 = vsel %vm1412, %v1405, %v1409
        %v1414 = vand.u32 2147483647, %v1404
        %vm1415 = vcmp.eq.f32.partialorder %v1414, 8.507059e+37
        %v1416 = vand.u32 %v1404, 2147483648
        %v1417 = vor.u32 1.1754944e-38, %v1416
        %v1418 = vsel %vm1415, %v1417, %v1413
        %v1419 = vmul.f32 %v1401, %v1418
        %1420 = vrot.lane.b32.xlu0 %v1287, 56
        %v1421 = vpop.permute.xlu0 %1420
        %v1424 = vsel %vm763, %v1419, 0
        %1426 = vmatpush.msra.mxu0 0.0
        %1427 = vmatpush.msra.mxu0 0.0
        %1428 = vmatpush.msra.mxu0 0.0
        %1429 = vmatpush.msra.mxu0 0.0
        %1430 = vmatpush.msra.mxu0 0.0
        %1431 = vmatpush.msra.mxu0 0.0
        %1432 = vmatpush.msra.mxu0 0.0
        %1433 = vmatpush.msra.mxu0 0.0
        %1434 = vmatpush.msra.mxu0 0.0
        %1435 = vmatpush.msra.mxu0 0.0
        %1436 = vmatpush.msra.mxu0 0.0
        %1437 = vmatpush.msra.mxu0 0.0
        %1438 = vmatpush.msra.mxu0 0.0
        %1439 = vmatpush.msra.mxu0 0.0
        %1440 = vmatpush.msra.mxu0 0.0
        %1441 = vmatpush.msra.mxu0 %v1421
        %1442 = vmatmul.f32.gmra.mxu0 %v1424
        %v1443 = vpop.f32.mrf.mxu0
        %v1444 = vadd.f32 0.0, %v1443
        %1445 = vdwg.mxu0
        %1446 = vrot.lane.b32.xlu0 %v1287, 112
        %v1447 = vpop.permute.xlu0 %1446
        %1448 = vrot.lane.b32.xlu0 %v1287, 80
        %v1449 = vpop.permute.xlu0 %1448
        %v1450 = vsel %vm763, %v1447, 0
        %v1452 = vsel %vm763, %v1449, 0
        %1454 = vmatpush.xpose.msra.mxu0 0.0
        %1455 = vmatpush.xpose.msra.mxu0 0.0
        %1456 = vmatpush.xpose.msra.mxu0 0.0
        %1457 = vmatpush.xpose.msra.mxu0 0.0
        %1458 = vmatpush.xpose.msra.mxu0 0.0
        %1459 = vmatpush.xpose.msra.mxu0 0.0
        %1460 = vmatpush.xpose.msra.mxu0 0.0
        %1461 = vmatpush.xpose.msra.mxu0 0.0
        %1462 = vmatpush.xpose.msra.mxu0 0.0
        %1463 = vmatpush.xpose.msra.mxu0 0.0
        %1464 = vmatpush.xpose.msra.mxu0 0.0
        %1465 = vmatpush.xpose.msra.mxu0 0.0
        %1466 = vmatpush.xpose.msra.mxu0 0.0
        %1467 = vmatpush.xpose.msra.mxu0 0.0
        %1468 = vmatpush.xpose.msra.mxu0 0.0
        %1469 = vmatpush.xpose.msra.mxu0 %v1452
        %1470 = vmatmul.f32.gmra.mxu0 %v1450
        %v1471 = vpop.f32.mrf.mxu0
        %v1472 = vadd.f32 0.0, %v1471
        %1473 = vdwg.mxu0
        %v1474 = vmul.f32 %v1472, 0.35355338
        %v1475 = vsel %vm763, %v1474, -inf
        %1476 = vmax.xlane.f32.xlu0 %v1475
        %v1477 = vpop.xlane.xlu0 %1476
        %v1478 = vsub.f32 %v1474, %v1477
        %v1479 = vmul.f32 %v1478, 1.442695
        %v1480 = vpow.pop %v1479
        %v1481 = vsel %vm763, %v1480, 0.0
        %1482 = vadd.xlane.f32.xlu0 %v1481
        %v1483 = vpop.xlane.xlu0 %1482
        %v1484 = vrcp.pop %v1483
        %v1485 = vmul.f32 %v1483, %v1484
        %v1486 = vsub.f32 1.0, %v1485
        %v1487 = vmul.f32 %v1484, %v1486
        %v1488 = vadd.f32 %v1484, %v1487
        %vm1489 = vweird.f32 %v1483
        %vm1490 = vweird.f32 %v1484
        %vm1491 = vmor %vm1489, %vm1490
        %v1492 = vsel %vm1491, %v1484, %v1488
        %v1493 = vand.u32 2147483647, %v1483
        %vm1494 = vcmp.eq.f32.partialorder %v1493, 8.507059e+37
        %v1495 = vand.u32 %v1483, 2147483648
        %v1496 = vor.u32 1.1754944e-38, %v1495
        %v1497 = vsel %vm1494, %v1496, %v1492
        %v1498 = vmul.f32 %v1480, %v1497
        %1499 = vrot.lane.b32.xlu0 %v1287, 48
        %v1500 = vpop.permute.xlu0 %1499
        %v1503 = vsel %vm763, %v1498, 0
        %1505 = vmatpush.msra.mxu0 0.0
        %1506 = vmatpush.msra.mxu0 0.0
        %1507 = vmatpush.msra.mxu0 0.0
        %1508 = vmatpush.msra.mxu0 0.0
        %1509 = vmatpush.msra.mxu0 0.0
        %1510 = vmatpush.msra.mxu0 0.0
        %1511 = vmatpush.msra.mxu0 0.0
        %1512 = vmatpush.msra.mxu0 0.0
        %1513 = vmatpush.msra.mxu0 0.0
        %1514 = vmatpush.msra.mxu0 0.0
        %1515 = vmatpush.msra.mxu0 0.0
        %1516 = vmatpush.msra.mxu0 0.0
        %1517 = vmatpush.msra.mxu0 0.0
        %1518 = vmatpush.msra.mxu0 0.0
        %1519 = vmatpush.msra.mxu0 0.0
        %1520 = vmatpush.msra.mxu0 %v1500
        %1521 = vmatmul.f32.gmra.mxu0 %v1503
        %v1522 = vpop.f32.mrf.mxu0
        %v1523 = vadd.f32 0.0, %v1522
        %1524 = vdwg.mxu0
        %1525 = vrot.lane.b32.xlu0 %v1287, 104
        %v1526 = vpop.permute.xlu0 %1525
        %1527 = vrot.lane.b32.xlu0 %v1287, 72
        %v1528 = vpop.permute.xlu0 %1527
        %v1529 = vsel %vm763, %v1526, 0
        %v1531 = vsel %vm763, %v1528, 0
        %1533 = vmatpush.xpose.msra.mxu0 0.0
        %1534 = vmatpush.xpose.msra.mxu0 0.0
        %1535 = vmatpush.xpose.msra.mxu0 0.0
        %1536 = vmatpush.xpose.msra.mxu0 0.0
        %1537 = vmatpush.xpose.msra.mxu0 0.0
        %1538 = vmatpush.xpose.msra.mxu0 0.0
        %1539 = vmatpush.xpose.msra.mxu0 0.0
        %1540 = vmatpush.xpose.msra.mxu0 0.0
        %1541 = vmatpush.xpose.msra.mxu0 0.0
        %1542 = vmatpush.xpose.msra.mxu0 0.0
        %1543 = vmatpush.xpose.msra.mxu0 0.0
        %1544 = vmatpush.xpose.msra.mxu0 0.0
        %1545 = vmatpush.xpose.msra.mxu0 0.0
        %1546 = vmatpush.xpose.msra.mxu0 0.0
        %1547 = vmatpush.xpose.msra.mxu0 0.0
        %1548 = vmatpush.xpose.msra.mxu0 %v1531
        %1549 = vmatmul.f32.gmra.mxu0 %v1529
        %v1550 = vpop.f32.mrf.mxu0
        %v1551 = vadd.f32 0.0, %v1550
        %1552 = vdwg.mxu0
        %v1553 = vmul.f32 %v1551, 0.35355338
        %v1554 = vsel %vm763, %v1553, -inf
        %1555 = vmax.xlane.f32.xlu0 %v1554
        %v1556 = vpop.xlane.xlu0 %1555
        %v1557 = vsub.f32 %v1553, %v1556
        %v1558 = vmul.f32 %v1557, 1.442695
        %v1559 = vpow.pop %v1558
        %v1560 = vsel %vm763, %v1559, 0.0
        %1561 = vadd.xlane.f32.xlu0 %v1560
        %v1562 = vpop.xlane.xlu0 %1561
        %v1563 = vrcp.pop %v1562
        %v1564 = vmul.f32 %v1562, %v1563
        %v1565 = vsub.f32 1.0, %v1564
        %v1566 = vmul.f32 %v1563, %v1565
        %v1567 = vadd.f32 %v1563, %v1566
        %vm1568 = vweird.f32 %v1562
        %vm1569 = vweird.f32 %v1563
        %vm1570 = vmor %vm1568, %vm1569
        %v1571 = vsel %vm1570, %v1563, %v1567
        %v1572 = vand.u32 2147483647, %v1562
        %vm1573 = vcmp.eq.f32.partialorder %v1572, 8.507059e+37
        %v1574 = vand.u32 %v1562, 2147483648
        %v1575 = vor.u32 1.1754944e-38, %v1574
        %v1576 = vsel %vm1573, %v1575, %v1571
        %v1577 = vmul.f32 %v1559, %v1576
        %1578 = vrot.lane.b32.xlu0 %v1287, 40
        %v1579 = vpop.permute.xlu0 %1578
        %v1582 = vsel %vm763, %v1577, 0
        %1584 = vmatpush.msra.mxu0 0.0
        %1585 = vmatpush.msra.mxu0 0.0
        %1586 = vmatpush.msra.mxu0 0.0
        %1587 = vmatpush.msra.mxu0 0.0
        %1588 = vmatpush.msra.mxu0 0.0
        %1589 = vmatpush.msra.mxu0 0.0
        %1590 = vmatpush.msra.mxu0 0.0
        %1591 = vmatpush.msra.mxu0 0.0
        %1592 = vmatpush.msra.mxu0 0.0
        %1593 = vmatpush.msra.mxu0 0.0
        %1594 = vmatpush.msra.mxu0 0.0
        %1595 = vmatpush.msra.mxu0 0.0
        %1596 = vmatpush.msra.mxu0 0.0
        %1597 = vmatpush.msra.mxu0 0.0
        %1598 = vmatpush.msra.mxu0 0.0
        %1599 = vmatpush.msra.mxu0 %v1579
        %1600 = vmatmul.f32.gmra.mxu0 %v1582
        %v1601 = vpop.f32.mrf.mxu0
        %v1602 = vadd.f32 0.0, %v1601
        %1603 = vdwg.mxu0
        %1605 = vrot.lane.b32.xlu0 %v1444, 8
        %v1606 = vpop.permute.xlu0 %1605
        %1609 = vrot.lane.b32.xlu0 %v1523, 16
        %v1610 = vpop.permute.xlu0 %1609
        %1613 = vrot.lane.b32.xlu0 %v1602, 24
        %v1614 = vpop.permute.xlu0 %1613
        %v1616 = vsel %vm763, %v1365, %v1606
        %v1617 = vsel %vm1089, %v1616, %v1610
        %v1618 = vsel %vm1091, %v1617, %v1614
        %s1619 = scalar_lea.vmem %s4, 32
        %v1620 = vld [vmem:[%s1619] sm:$0xff]
        %v1621 = vld [vmem:[%s1619 + $0x8] sm:$0xff]
        %v1622 = vld [vmem:[%s1619 + $0x10] sm:$0xff]
        %v1623 = vld [vmem:[%s1619 + $0x18] sm:$0xff]
        %s1624 = scalar_lea.vmem [#allocation8], 1
        %v1625 = vld [vmem:[%s1624] sm:$0x1]
        %v1627 = vperm.slane %v1625, 0
        %v1630 = vsel %vm695, %v1618, 0
        %1632 = vmatpush.msra.mxu0 0.0
        %1633 = vmatpush.msra.mxu0 0.0
        %1634 = vmatpush.msra.mxu0 0.0
        %1635 = vmatpush.msra.mxu0 0.0
        %1636 = vmatpush.msra.mxu0 0.0
        %1637 = vmatpush.msra.mxu0 0.0
        %1638 = vmatpush.msra.mxu0 0.0
        %1639 = vmatpush.msra.mxu0 0.0
        %1640 = vmatpush.msra.mxu0 0.0
        %1641 = vmatpush.msra.mxu0 0.0
        %1642 = vmatpush.msra.mxu0 0.0
        %1643 = vmatpush.msra.mxu0 0.0
        %1644 = vmatpush.msra.mxu0 %v1623
        %1645 = vmatpush.msra.mxu0 %v1622
        %1646 = vmatpush.msra.mxu0 %v1621
        %1647 = vmatpush.msra.mxu0 %v1620
        %1648 = vmatmul.f32.gmra.mxu0 %v1630
        %v1649 = vpop.f32.mrf.mxu0
        %v1650 = vadd.f32 %v1627, %v1649
        %1651 = vdwg.mxu0
        %v1652 = vadd.f32 %v1255, %v1650
        %s1653 = scalar_lea.vmem %s6, 2
        %v1654 = vld [vmem:[%s1653] sm:$0x3]
        %v1655 = vsel %vm695, %v1652, 0.0
        %1656 = vadd.xlane.f32.xlu0 %v1655
        %v1657 = vpop.xlane.xlu0 %1656
        %v1658 = vmul.f32 %v1657, %v705
        %v1659 = vsub.f32 %v1652, %v1658
        %v1660 = vmul.f32 %v1659, %v1659
        %v1661 = vsel %vm695, %v1660, 0.0
        %1662 = vadd.xlane.f32.xlu0 %v1661
        %v1663 = vpop.xlane.xlu0 %1662
        %v1664 = vmul.f32 %v1663, %v705
        %v1665 = vadd.f32 %v1664, 1e-12
        %v1666 = vrsqrt.pop %v1665
        %v1667 = vmul.f32 %v1666, %v1665
        %v1668 = vmul.f32 %v1667, %v1666
        %v1669 = vmul.f32 0.5, %v1668
        %v1670 = vsub.f32 1.5, %v1669
        %v1671 = vmul.f32 %v1666, %v1670
        %vm1672 = vweird.f32 %v1665
        %vm1673 = vweird.f32 %v1666
        %vm1674 = vmor %vm1672, %vm1673
        %v1675 = vsel %vm1674, %v1666, %v1671
        %v1676 = vmul.f32 %v1659, %v1675
        %v1677 = vperm.slane %v1654, 0
        %v1678 = vmul.f32 %v1676, %v1677
        %v1679 = vperm.slane %v1654, 1
        %v1680 = vadd.f32 %v1678, %v1679
        %s1681 = scalar_lea.vmem %s7, 32
        %v1682 = vld [vmem:[%s1681] sm:$0xff]
        %v1683 = vld [vmem:[%s1681 + $0x8] sm:$0xff]
        %v1684 = vld [vmem:[%s1681 + $0x10] sm:$0xff]
        %v1685 = vld [vmem:[%s1681 + $0x18] sm:$0xff]
        %s1686 = scalar_lea.vmem [#allocation10], 1
        %v1687 = vld [vmem:[%s1686] sm:$0x1]
        %v1689 = vperm.slane %v1687, 0
        %v1692 = vsel %vm695, %v1680, 0
        %1694 = vmatpush.msra.mxu0 0.0
        %1695 = vmatpush.msra.mxu0 0.0
        %1696 = vmatpush.msra.mxu0 0.0
        %1697 = vmatpush.msra.mxu0 0.0
        %1698 = vmatpush.msra.mxu0 0.0
        %1699 = vmatpush.msra.mxu0 0.0
        %1700 = vmatpush.msra.mxu0 0.0
        %1701 = vmatpush.msra.mxu0 0.0
        %1702 = vmatpush.msra.mxu0 0.0
        %1703 = vmatpush.msra.mxu0 0.0
        %1704 = vmatpush.msra.mxu0 0.0
        %1705 = vmatpush.msra.mxu0 0.0
        %1706 = vmatpush.msra.mxu0 %v1685
        %1707 = vmatpush.msra.mxu0 %v1684
        %1708 = vmatpush.msra.mxu0 %v1683
        %1709 = vmatpush.msra.mxu0 %v1682
        %1710 = vmatmul.f32.gmra.mxu0 %v1692
        %v1711 = vpop.f32.mrf.mxu0
        %v1712 = vadd.f32 %v1689, %v1711
        %1713 = vdwg.mxu0
        %v1714 = vmul.f32 %v1712, 0.5
        %v1715 = vmul.f32 %v1712, 0.044715
        %v1716 = vmul.f32 %v1715, %v1712
        %v1717 = vmul.f32 %v1716, %v1712
        %v1718 = vadd.f32 %v1712, %v1717
        %v1719 = vmul.f32 %v1718, 0.7978846
        %v1720 = vtanh.pop %v1719
        %v1721 = vadd.f32 %v1720, 1.0
        %v1722 = vmul.f32 %v1714, %v1721
        %s1723 = scalar_lea.vmem %s9, 64
        %v1724 = vld [vmem:[%s1723] sm:$0xff]
        %v1725 = vld [vmem:[%s1723 + $0x8] sm:$0xff]
        %v1726 = vld [vmem:[%s1723 + $0x10] sm:$0xff]
        %v1727 = vld [vmem:[%s1723 + $0x18] sm:$0xff]
        %v1728 = vld [vmem:[%s1723 + $0x20] sm:$0xff]
        %v1729 = vld [vmem:[%s1723 + $0x28] sm:$0xff]
        %v1730 = vld [vmem:[%s1723 + $0x30] sm:$0xff]
        %v1731 = vld [vmem:[%s1723 + $0x38] sm:$0xff]
        %s1732 = scalar_lea.vmem [#allocation11], 1
        %v1733 = vld [vmem:[%s1732] sm:$0x1]
        %v1735 = vperm.slane %v1733, 0
        %v1738 = vsel %vm1204, %v1722, 0
        %1740 = vmatpush.msra.mxu0 0.0
        %1741 = vmatpush.msra.mxu0 0.0
        %1742 = vmatpush.msra.mxu0 0.0
        %1743 = vmatpush.msra.mxu0 0.0
        %1744 = vmatpush.msra.mxu0 0.0
        %1745 = vmatpush.msra.mxu0 0.0
        %1746 = vmatpush.msra.mxu0 0.0
        %1747 = vmatpush.msra.mxu0 0.0
        %1748 = vmatpush.msra.mxu0 %v1731
        %1749 = vmatpush.msra.mxu0 %v1730
        %1750 = vmatpush.msra.mxu0 %v1729
        %1751 = vmatpush.msra.mxu0 %v1728
        %1752 = vmatpush.msra.mxu0 %v1727
        %1753 = vmatpush.msra.mxu0 %v1726
        %1754 = vmatpush.msra.mxu0 %v1725
        %1755 = vmatpush.msra.mxu0 %v1724
        %1756 = vmatmul.f32.gmra.mxu0 %v1738
        %v1757 = vpop.f32.mrf.mxu0
        %v1758 = vadd.f32 %v1735, %v1757
        %1759 = vdwg.mxu0
        %v1760 = vadd.f32 %v1680, %v1758
        %s1761 = scalar_lea.vmem %s11, 2
        %v1762 = vld [vmem:[%s1761] sm:$0x3]
        %v1763 = vsel %vm695, %v1760, 0.0
        %1764 = vadd.xlane.f32.xlu0 %v1763
        %v1765 = vpop.xlane.xlu0 %1764
        %v1766 = vmul.f32 %v1765, %v705
        %v1767 = vsub.f32 %v1760, %v1766
        %v1768 = vmul.f32 %v1767, %v1767
        %v1769 = vsel %vm695, %v1768, 0.0
        %1770 = vadd.xlane.f32.xlu0 %v1769
        %v1771 = vpop.xlane.xlu0 %1770
        %v1772 = vmul.f32 %v1771, %v705
        %v1773 = vadd.f32 %v1772, 1e-12
        %v1774 = vrsqrt.pop %v1773
        %v1775 = vmul.f32 %v1774, %v1773
        %v1776 = vmul.f32 %v1775, %v1774
        %v1777 = vmul.f32 0.5, %v1776
        %v1778 = vsub.f32 1.5, %v1777
        %v1779 = vmul.f32 %v1774, %v1778
        %vm1780 = vweird.f32 %v1773
        %vm1781 = vweird.f32 %v1774
        %vm1782 = vmor %vm1780, %vm1781
        %v1783 = vsel %vm1782, %v1774, %v1779
        %v1784 = vmul.f32 %v1767, %v1783
        %v1785 = vperm.slane %v1762, 0
        %v1786 = vmul.f32 %v1784, %v1785
        %v1787 = vperm.slane %v1762, 1
        %v1788 = vadd.f32 %v1786, %v1787
        %v1789 = vld [vmem:[#allocation13] sm:$0xff]
        %v1790 = vld [vmem:[#allocation13 + $0x8] sm:$0xff]
        %v1791 = vld [vmem:[#allocation13 + $0x10] sm:$0xff]
        %v1792 = vld [vmem:[#allocation13 + $0x18] sm:$0xff]
        %v1793 = vld [vmem:[%s13] sm:$0x1]
        %v1795 = vsel %vm695, %v1788, 0
        %1797 = vmatpush.msra.mxu0 0.0
        %1798 = vmatpush.msra.mxu0 0.0
        %1799 = vmatpush.msra.mxu0 0.0
        %1800 = vmatpush.msra.mxu0 0.0
        %1801 = vmatpush.msra.mxu0 0.0
        %1802 = vmatpush.msra.mxu0 0.0
        %1803 = vmatpush.msra.mxu0 0.0
        %1804 = vmatpush.msra.mxu0 0.0
        %1805 = vmatpush.msra.mxu0 0.0
        %1806 = vmatpush.msra.mxu0 0.0
        %1807 = vmatpush.msra.mxu0 0.0
        %1808 = vmatpush.msra.mxu0 0.0
        %1809 = vmatpush.msra.mxu0 %v1792
        %1810 = vmatpush.msra.mxu0 %v1791
        %1811 = vmatpush.msra.mxu0 %v1790
        %1812 = vmatpush.msra.mxu0 %v1789
        %1813 = vmatmul.f32.gmra.mxu0 %v1795
        %v1814 = vpop.f32.mrf.mxu0
        %v1815 = vadd.f32 %v1793, %v1814
        %1816 = vdwg.mxu0
        %v1817 = vtanh.pop %v1815
        %v1818 = vld [vmem:[#allocation14] sm:$0xff]
        %v1819 = vld [vmem:[#allocation14 + $0x8] sm:$0xff]
        %v1820 = vld [vmem:[#allocation14 + $0x10] sm:$0xff]
        %v1821 = vld [vmem:[#allocation14 + $0x18] sm:$0xff]
        %v1822 = vld [vmem:[%s15] sm:$0x1]
        %v1824 = vsel %vm695, %v1817, 0
        %1826 = vmatpush.msra.mxu0 0.0
        %1827 = vmatpush.msra.mxu0 0.0
        %1828 = vmatpush.msra.mxu0 0.0
        %1829 = vmatpush.msra.mxu0 0.0
        %1830 = vmatpush.msra.mxu0 0.0
        %1831 = vmatpush.msra.mxu0 0.0
        %1832 = vmatpush.msra.mxu0 0.0
        %1833 = vmatpush.msra.mxu0 0.0
        %1834 = vmatpush.msra.mxu0 0.0
        %1835 = vmatpush.msra.mxu0 0.0
        %1836 = vmatpush.msra.mxu0 0.0
        %1837 = vmatpush.msra.mxu0 0.0
        %1838 = vmatpush.msra.mxu0 %v1821
        %1839 = vmatpush.msra.mxu0 %v1820
        %1840 = vmatpush.msra.mxu0 %v1819
        %1841 = vmatpush.msra.mxu0 %v1818
        %1842 = vmatmul.f32.gmra.mxu0 %v1824
        %v1843 = vpop.f32.mrf.mxu0
        %v1844 = vadd.f32 %v1822, %v1843
        %1845 = vdwg.mxu0
        %v1846 = vld [vmem:[%s692] sm:$0x1]
        %vm1847 = vcmp.ge.f32.partialorder %v1846, 0.5
        %v1848 = vmul.f32 %v1844, 2.0
        %v1849 = vsel %vm1847, %v1848, 0.0
        %1850 = vst [vmem:[%s689] sm:$0x1] %v1849
        %s1851 = sand.u32 %s413, 1
        %s1852 = scalar_lea.sflag [#allocation4], %s1851
        %s1853 = sand.u32 %s413, 1
        %s1854 = scalar_lea.vmem [#allocation16], %s1853
        // Predicated region
        $region121: #{tpu_custom_call.1} parent=87 // pred_check
          %p1855 = pneg %p423
        $region122: #{tpu_custom_call.1} parent=87 // pred_check_branch
          %1857 = sbr.rel (%p1855) target = $region124
        $region123: #{tpu_custom_call.1} parent=87 // pred_region
          %1859 = vsyncadd %s1852, 0
          %s1860 = scalar_lea.hbm %s17, %s38
          %s1862 = sshll.u32 %s1854, 4
          %s1863 = int_to_ptr.vmem [resolvable:$true] %s1862
          %s1864 = sshll.u32 %s1860, 4
          %s1865 = int_to_ptr.hbm [resolvable:$true] %s1864
          %1867 = dma.vmem_to_hbm [thread:$0]  %s1863, 16, %s1865, %s1852
        $region124: #{tpu_custom_call.1} parent=87 // pred_fallthru
          _
      $region88: #{tpu_custom_call.1} parent=5 // pred_fallthru
        _
      %p1868 = scmp.le.s32.totalorder 2, %s33
      // Predicated region
      $region125: #{tpu_custom_call.1} parent=5 // pred_check
        %p1869 = pneg %p1868
      $region126: #{tpu_custom_call.1} parent=5 // pred_check_branch
        %1871 = sbr.rel (%p1869) target = $region128
      $region127: #{tpu_custom_call.1} parent=5 // pred_region
        %s1872 = ssub.s32 %s33, 2
        // Predicated region
        $region129: #{tpu_custom_call.1} parent=127 // pred_check
          %p1873 = pneg %p429
        $region130: #{tpu_custom_call.1} parent=127 // pred_check_branch
          %1875 = sbr.rel (%p1873) target = $region132
        $region131: #{tpu_custom_call.1} parent=127 // pred_region
          %s1876 = sand.u32 %s414, 1
          %s1877 = scalar_lea.sflag [#allocation4], %s1876
          %s1878 = sand.u32 %s414, 1
          %s1879 = scalar_lea.vmem [#allocation16], %s1878
          %1881 = dma.done %s1877, 16
        $region132: #{tpu_custom_call.1} parent=127 // pred_fallthru
          _
      $region128: #{tpu_custom_call.1} parent=5 // pred_fallthru
        _
    $region6: #{tpu_custom_call.1} parent=1 // loop_footer
      %s37 = sadd.s32 1, %s33
    $region7: #{tpu_custom_call.1} parent=1 // loop_footer_branch
      %32 = sbr.rel target = $region3
    $region8: #{tpu_custom_call.1} parent=1 // loop_exit
      _
    %1882 = vsyncpa [#allocation3], 1
    %s1883 = scalar_lea.sflag [#allocation3], 1
    %1884 = vsyncpa %s1883, 1
    %1885 = vsyncpa [#allocation6], 1
    %1886 = vsyncpa [#allocation9], 1
    %1887 = vsyncpa [#allocation12], 1
    %1888 = vsyncpa [#allocation15], 1
    %1889 = vsyncpa [#allocation4], 1
    %s1890 = scalar_lea.sflag [#allocation4], 1
    %1891 = vsyncpa %s1890, 1

</llo_original>
